<compile_context>
chip_gen: v7x
topology: tpu7x:2x2x1
jax: 0.10.0
libtpu: 0.0.40
codegen_flags: <defaults>
</compile_context>

<pallas_src>
import functools

import jax
import jax.numpy as jnp
import numpy as np
from jax.experimental import pallas as pl
from jax.experimental.pallas import tpu as pltpu


def _cdiv(a, b):
    return -(-a // b)


# ---------------------------------------------------------------------------
# Pallas kernel
# ---------------------------------------------------------------------------
def multicnn_kernel(x_ref, *refs, cnn_num, out_dim, block_kd, f_total, rows_dec):
    """refs = 6 fused-weight refs per block (3 blocks) + o_ref + acc scratch.

    Per block (cnn axis already folded into the channel/lane dimension, G = cnn_num*C_out):
      wa (Gin, G)    bf16  -- Conv1d(kernel_size=1) weights (x @ W; block-diag across cnns,
                              plain lane-concat for the shared-input first block)
      ba (1, G)      f32   -- its bias
      wf (K*G, G)    bf16  -- K-tap conv weights, taps stacked on rows, cnn-block-diagonal
      bb (1, G)      f32   -- its bias
      sc (1, G)      f32   -- folded BatchNorm scale (eval mode)
      sh (1, G)      f32   -- folded BatchNorm shift (eval mode)
    block_kd : static ((K, dilation), ...) per block (dilation = deferred stride).
    f_total  : product of the conv strides (final decimation factor).
    rows_dec : decimated rows per output block.
    """
    w_refs, o_ref, acc_ref = refs[:-2], refs[-2], refs[-1]
    h = x_ref[...]                          # (rows_blk, C_in) bf16, merged samples
    y = None
    n_blocks = len(block_kd)
    for blk, (k, d) in enumerate(block_kd):
        wa, ba, wf, bb, sc, sh = w_refs[blk * 6:(blk + 1) * 6]
        # Conv1d(kernel_size=1) for ALL cnns at once: one channel matmul (+bias, ReLU).
        a = jnp.dot(h, wa[...], preferred_element_type=jnp.float32) + ba[...]
        a = jnp.maximum(a, 0.0).astype(jnp.bfloat16)   # bf16 BEFORE the tap shuffles
        # K-tap conv (dilation d = deferred stride): lane-concat the K shifted slices
        # and contract once against the tap-stacked, cnn-block-diagonal weights.
        r_out = a.shape[0] - (k - 1) * d
        cols = jnp.concatenate(
            [a[j * d:j * d + r_out, :] for j in range(k)], axis=1)
        y = jnp.dot(cols, wf[...], preferred_element_type=jnp.float32) + bb[...]
        y = jnp.maximum(y, 0.0)
        # BatchNorm1d (eval mode, folded); Dropout == identity in eval mode.
        y = y * sc[...] + sh[...]
        if blk + 1 < n_blocks:
            h = y.astype(jnp.bfloat16)
    # Stage the full-resolution result in VMEM (zero the tiny tail so every row
    # read below is deterministic), then read back only the decimated rows.
    g_last = acc_ref.shape[1]
    r_full = y.shape[0]
    acc_ref[0:r_full, :] = y
    if r_full < acc_ref.shape[0]:
        acc_ref[r_full:, :] = jnp.zeros(
            (acc_ref.shape[0] - r_full, g_last), jnp.float32)
    if f_total == 1:
        row_sel = pl.ds(0, rows_dec)
    else:
        row_sel = pl.ds(0, rows_dec, stride=f_total)
    dec = acc_ref[row_sel, :]               # (rows_dec, cnn_num*out_dim)
    # torch.stack(node_emb, 0).max(0): reduce across the cnn lane groups.
    m = dec[:, 0:out_dim]
    for i in range(1, cnn_num):
        m = jnp.maximum(m, dec[:, i * out_dim:(i + 1) * out_dim])
    o_ref[...] = m.astype(o_ref.dtype)      # full-block, lane-contiguous store


# ---------------------------------------------------------------------------
# Parameters (deterministic, in-script; shapes follow CNN1d.__init__ w/ layers=3)
# ---------------------------------------------------------------------------
def init_params(key, cnn_num, in_dim, hid_dim, out_dim, kernel=3):
    b1_dim = hid_dim // 2
    block_dims = [(in_dim, b1_dim, 3), (b1_dim, hid_dim, kernel),
                  (hid_dim, out_dim, kernel)]
    eps = 1e-5
    params = []
    for ci, co, k in block_dims:
        key, k1, k2, k3, k4 = jax.random.split(key, 5)
        p = dict(
            # Conv1d(ci, co, kernel_size=1): stored as (C_in, C_out) for x @ W
            wa=jax.random.normal(k1, (cnn_num, ci, co), jnp.float32) / np.sqrt(ci),
            ba=jax.random.normal(k2, (cnn_num, 1, co), jnp.float32) * 0.05,
            # Conv1d(co, co, kernel_size=k): stored as (K, C_in, C_out)
            wb=jax.random.normal(k3, (cnn_num, k, co, co), jnp.float32) / np.sqrt(co * k),
            bb=jax.random.normal(k4, (cnn_num, 1, co), jnp.float32) * 0.05,
        )
        # BatchNorm1d at PyTorch init, eval mode: gamma=1, beta=0, mean=0, var=1
        gamma = jnp.ones((cnn_num, 1, co), jnp.float32)
        beta = jnp.zeros((cnn_num, 1, co), jnp.float32)
        mean = jnp.zeros((cnn_num, 1, co), jnp.float32)
        var = jnp.ones((cnn_num, 1, co), jnp.float32)
        p['scale'] = gamma / jnp.sqrt(var + eps)
        p['shift'] = beta - mean * p['scale']
        params.append(p)
    return params


# ---------------------------------------------------------------------------
# Weight fusion: fold the cnn axis into the channel (lane) dimension.
# ---------------------------------------------------------------------------
def _fuse_block(p, shared_input):
    cnn, ci, co = p['wa'].shape
    k = p['wb'].shape[1]
    g = cnn * co
    if shared_input:
        # first block: all cnns read the same input channels -> lane concat
        wa_f = jnp.concatenate([p['wa'][i] for i in range(cnn)], axis=1)
    else:
        # later blocks: each cnn reads its own lane group -> block diagonal
        wa_f = jax.scipy.linalg.block_diag(*[p['wa'][i] for i in range(cnn)])
    # K-tap conv: taps stacked on rows, cnn-block-diagonal within each tap.
    wf_f = jnp.concatenate(
        [jax.scipy.linalg.block_diag(*[p['wb'][i, j] for i in range(cnn)])
         for j in range(k)], axis=0)                       # (K*g, g)
    ba_f = p['ba'].reshape(1, g)
    bb_f = p['bb'].reshape(1, g)
    sc_f = p['scale'].reshape(1, g)
    sh_f = p['shift'].reshape(1, g)
    return (wa_f.astype(jnp.bfloat16), ba_f, wf_f.astype(jnp.bfloat16),
            bb_f, sc_f, sh_f)


# ---------------------------------------------------------------------------
# Wrapper (layout plumbing + pallas_call)
# ---------------------------------------------------------------------------
def multicnn_encoder(x, params, *, cnn_num, out_dim, stride=1, tile_bn=32):
    B, C, N, T = x.shape
    BN = B * N
    kernels = tuple(int(p['wb'].shape[1]) for p in params)       # (3, K, K, ...)
    strides = (1,) + (2,) * (len(params) - 2) + (stride,)        # b1 / bx... / bn

    # Static length bookkeeping: real (PyTorch) lengths and the deferred-stride
    # ("a trous") full-resolution lengths computed in-kernel.
    dils, l_real, l_full, f = [], T, T, 1
    for k, s in zip(kernels, strides):
        dils.append(f)                     # dilation of this block's K-tap conv
        l_full -= (k - 1) * f              # full-res rows produced in-kernel
        l_real = (l_real - k) // s + 1     # rows PyTorch would produce
        f *= s
    f_total, l_out = f, l_real
    assert l_out >= 1 and l_full >= 1, "sequence too short for this config"
    # a-trous identity / no-contamination guard: every kept (decimated) row must
    # lie inside the valid full-resolution range of its own sample segment.
    assert f_total * (l_out - 1) <= l_full - 1, (f_total, l_out, l_full)

    # Per-sample row segment: multiple of 8*f_total so both the full-res block
    # and the decimated block stay sublane (8) aligned.
    seg = _cdiv(T, 8 * f_total) * 8 * f_total
    seg_dec = seg // f_total
    assert seg >= T

    # Tile sizing: sweep tile_bn 32-128 for production shapes (footprint is a
    # few hundred KiB even at 128); keep >= 2 tiles so both v7x TCs get work.
    tile_bn = max(1, min(tile_bn, BN))
    if BN >= 2:
        tile_bn = min(tile_bn, _cdiv(BN, 2))
    bn_pad = _cdiv(BN, tile_bn) * tile_bn
    n_tiles = bn_pad // tile_bn
    rows_blk = tile_bn * seg               # merged full-res rows per grid step
    rows_dec = tile_bn * seg_dec           # decimated rows written per grid step

    # (B, C, N, T) -> (B*N, T, C), zero-pad samples/time, merge to 2-D, bf16.
    x_btc = jnp.transpose(x, (0, 2, 3, 1)).reshape(BN, T, C).astype(jnp.float32)
    x_btc = jnp.pad(x_btc, ((0, bn_pad - BN), (0, seg - T), (0, 0)))
    x2d = x_btc.reshape(bn_pad * seg, C).astype(jnp.bfloat16)

    # Fused (cnn-folded) weights: bf16 matmul operands, f32 epilogue params;
    # all fully resident (full-array blocks, constant index maps).
    weight_args, weight_specs = [], []
    for bi, p in enumerate(params):
        for arr in _fuse_block(p, shared_input=(bi == 0)):
            weight_args.append(arr)
            weight_specs.append(pl.BlockSpec(arr.shape, lambda i: (0, 0)))

    kernel_fn = functools.partial(
        multicnn_kernel, cnn_num=cnn_num, out_dim=out_dim,
        block_kd=tuple(zip(kernels, dils)), f_total=f_total, rows_dec=rows_dec)

    out2d = pl.pallas_call(
        kernel_fn,
        out_shape=jax.ShapeDtypeStruct((bn_pad * seg_dec, out_dim), jnp.float32),
        grid=(n_tiles,),
        in_specs=[pl.BlockSpec((rows_blk, C), lambda i: (i, 0))] + weight_specs,
        out_specs=pl.BlockSpec((rows_dec, out_dim), lambda i: (i, 0)),
        scratch_shapes=[pltpu.VMEM((rows_blk, cnn_num * out_dim), jnp.float32)],
        compiler_params=pltpu.CompilerParams(
            dimension_semantics=("parallel",)),
    )(x2d, *weight_args)

    # Undo padding and emit the PyTorch layout (B, N, out_dim, L_out); the
    # stride decimation already happened in-kernel.
    out = out2d.reshape(bn_pad, seg_dec, out_dim)[:BN, :l_out, :]
    return jnp.transpose(out, (0, 2, 1)).reshape(B, N, out_dim, l_out)
    # TODO(synk): linear=True head (flatten + nn.Linear) not exercised (module default is linear=False).


# ---------------------------------------------------------------------------
# Plain-JAX reference (PyTorch semantics, same bf16-operand / f32-accumulate
# matmul convention as the kernel) for the correctness check
# ---------------------------------------------------------------------------
def ref_forward(x, params, *, cnn_num, stride=1):
    B, C, N, T = x.shape
    kernels = tuple(int(p['wb'].shape[1]) for p in params)
    strides = (1,) + (2,) * (len(params) - 2) + (stride,)
    xr = jnp.transpose(x, (0, 2, 3, 1)).reshape(B * N, T, C).astype(jnp.float32)
    outs = []
    for i in range(cnn_num):
        h = xr
        for p, k, s in zip(params, kernels, strides):
            a = jnp.einsum('btc,cd->btd', h.astype(jnp.bfloat16),
                           p['wa'][i].astype(jnp.bfloat16),
                           preferred_element_type=jnp.float32) + p['ba'][i]
            a = jnp.maximum(a, 0.0)
            lo = (a.shape[1] - k) // s + 1
            a_bf = a.astype(jnp.bfloat16)
            acc = None
            for j in range(k):
                sl = a_bf[:, j: j + s * (lo - 1) + 1: s, :]
                t = jnp.einsum('btc,cd->btd', sl, p['wb'][i, j].astype(jnp.bfloat16),
                               preferred_element_type=jnp.float32)
                acc = t if acc is None else acc + t
            y = jnp.maximum(acc + p['bb'][i], 0.0)
            h = y * p['scale'][i] + p['shift'][i]
        outs.append(h)
    out = jnp.max(jnp.stack(outs, 0), axis=0)           # (B*N, L_out, out_dim)
    return jnp.transpose(out, (0, 2, 1)).reshape(B, N, out.shape[2], out.shape[1])


if __name__ == "__main__":
    # Config 1: small shapes consistent with the module; x is (B, C, N, T)
    B, C, N, T = 2, 8, 4, 32
    cnn_num, hid_dim, out_dim, kernel, stride = 2, 16, 16, 3, 1

    key = jax.random.PRNGKey(0)
    kx, kp = jax.random.split(key)
    x = jax.random.normal(kx, (B, C, N, T), jnp.float32)
    params = init_params(kp, cnn_num, in_dim=C, hid_dim=hid_dim,
                         out_dim=out_dim, kernel=kernel)

    out = jax.block_until_ready(
        multicnn_encoder(x, params, cnn_num=cnn_num, out_dim=out_dim, stride=stride))
    ref = jax.block_until_ready(
        ref_forward(x, params, cnn_num=cnn_num, stride=stride))
    assert out.shape == ref.shape, (out.shape, ref.shape)
    # Tolerance covers bf16-operand rounding from differing (f32-accumulated)
    # summation orders between the fused-tap kernel and the reference.
    np.testing.assert_allclose(np.asarray(out), np.asarray(ref), rtol=1e-2, atol=2e-2)

    # Config 2: stride > 1, larger kernel, 3 cnns -> exercises the deferred-
    # stride (a-trous) path with f_total = 4 and the in-kernel decimation.
    B2, C2, N2, T2 = 2, 8, 3, 48
    cnn2, hid2, out2, kern2, str2 = 3, 16, 16, 5, 2
    k2x, k2p = jax.random.split(jax.random.PRNGKey(1))
    x2 = jax.random.normal(k2x, (B2, C2, N2, T2), jnp.float32)
    params2 = init_params(k2p, cnn2, in_dim=C2, hid_dim=hid2,
                          out_dim=out2, kernel=kern2)
    o2 = jax.block_until_ready(
        multicnn_encoder(x2, params2, cnn_num=cnn2, out_dim=out2, stride=str2))
    r2 = jax.block_until_ready(
        ref_forward(x2, params2, cnn_num=cnn2, stride=str2))
    assert o2.shape == r2.shape, (o2.shape, r2.shape)
    np.testing.assert_allclose(np.asarray(o2), np.asarray(r2), rtol=1e-2, atol=2e-2)

    print("KERNEL_OK")
</pallas_src>

<mosaic_0001>
module attributes {stable_mosaic.version = 11 : i64} {
  func.func @multicnn_kernel(%arg0: i32, %arg1: memref<128x8xbf16, #tpu.memory_space<vmem>>, %arg2: memref<8x16xbf16, #tpu.memory_space<vmem>>, %arg3: memref<1x16xf32, #tpu.memory_space<vmem>>, %arg4: memref<48x16xbf16, #tpu.memory_space<vmem>>, %arg5: memref<1x16xf32, #tpu.memory_space<vmem>>, %arg6: memref<1x16xf32, #tpu.memory_space<vmem>>, %arg7: memref<1x16xf32, #tpu.memory_space<vmem>>, %arg8: memref<16x32xbf16, #tpu.memory_space<vmem>>, %arg9: memref<1x32xf32, #tpu.memory_space<vmem>>, %arg10: memref<96x32xbf16, #tpu.memory_space<vmem>>, %arg11: memref<1x32xf32, #tpu.memory_space<vmem>>, %arg12: memref<1x32xf32, #tpu.memory_space<vmem>>, %arg13: memref<1x32xf32, #tpu.memory_space<vmem>>, %arg14: memref<32x32xbf16, #tpu.memory_space<vmem>>, %arg15: memref<1x32xf32, #tpu.memory_space<vmem>>, %arg16: memref<96x32xbf16, #tpu.memory_space<vmem>>, %arg17: memref<1x32xf32, #tpu.memory_space<vmem>>, %arg18: memref<1x32xf32, #tpu.memory_space<vmem>>, %arg19: memref<1x32xf32, #tpu.memory_space<vmem>>, %arg20: memref<64x16xf32, #tpu.memory_space<vmem>>, %arg21: memref<128x32xf32, #tpu.memory_space<vmem>>) attributes {dimension_semantics = [#tpu.dimension_semantics<parallel>], iteration_bounds = array<i64: 2>, scalar_prefetch = 0 : i64, scratch_operands = 1 : i64, tpu.core_type = #tpu.core_type<tc>, window_params = [{transform_indices = @transform_0, window_bounds = array<i64: 128, 8>}, {pipeline_mode = #tpu.pipeline_mode<synchronous>, transform_indices = @transform_1, window_bounds = array<i64: 8, 16>}, {pipeline_mode = #tpu.pipeline_mode<synchronous>, transform_indices = @transform_2, window_bounds = array<i64: 1, 16>}, {pipeline_mode = #tpu.pipeline_mode<synchronous>, transform_indices = @transform_3, window_bounds = array<i64: 48, 16>}, {pipeline_mode = #tpu.pipeline_mode<synchronous>, transform_indices = @transform_4, window_bounds = array<i64: 1, 16>}, {pipeline_mode = #tpu.pipeline_mode<synchronous>, transform_indices = @transform_5, window_bounds = array<i64: 1, 16>}, {pipeline_mode = #tpu.pipeline_mode<synchronous>, transform_indices = @transform_6, window_bounds = array<i64: 1, 16>}, {pipeline_mode = #tpu.pipeline_mode<synchronous>, transform_indices = @transform_7, window_bounds = array<i64: 16, 32>}, {pipeline_mode = #tpu.pipeline_mode<synchronous>, transform_indices = @transform_8, window_bounds = array<i64: 1, 32>}, {pipeline_mode = #tpu.pipeline_mode<synchronous>, transform_indices = @transform_9, window_bounds = array<i64: 96, 32>}, {pipeline_mode = #tpu.pipeline_mode<synchronous>, transform_indices = @transform_10, window_bounds = array<i64: 1, 32>}, {pipeline_mode = #tpu.pipeline_mode<synchronous>, transform_indices = @transform_11, window_bounds = array<i64: 1, 32>}, {pipeline_mode = #tpu.pipeline_mode<synchronous>, transform_indices = @transform_12, window_bounds = array<i64: 1, 32>}, {pipeline_mode = #tpu.pipeline_mode<synchronous>, transform_indices = @transform_13, window_bounds = array<i64: 32, 32>}, {pipeline_mode = #tpu.pipeline_mode<synchronous>, transform_indices = @transform_14, window_bounds = array<i64: 1, 32>}, {pipeline_mode = #tpu.pipeline_mode<synchronous>, transform_indices = @transform_15, window_bounds = array<i64: 96, 32>}, {pipeline_mode = #tpu.pipeline_mode<synchronous>, transform_indices = @transform_16, window_bounds = array<i64: 1, 32>}, {pipeline_mode = #tpu.pipeline_mode<synchronous>, transform_indices = @transform_17, window_bounds = array<i64: 1, 32>}, {pipeline_mode = #tpu.pipeline_mode<synchronous>, transform_indices = @transform_18, window_bounds = array<i64: 1, 32>}, {transform_indices = @transform_19, window_bounds = array<i64: 64, 16>}]} {
    %c0 = arith.constant 0 : index
    %c0_0 = arith.constant 0 : index
    %0 = vector.load %arg1[%c0, %c0_0] : memref<128x8xbf16, #tpu.memory_space<vmem>>, vector<128x8xbf16>
    %c0_1 = arith.constant 0 : index
    %c0_2 = arith.constant 0 : index
    %1 = vector.load %arg2[%c0_1, %c0_2] : memref<8x16xbf16, #tpu.memory_space<vmem>>, vector<8x16xbf16>
    %cst = arith.constant dense<0.000000e+00> : vector<128x16xf32>
    %2 = tpu.matmul %0, %1, %cst {dimension_numbers = #tpu.dot_dimension_numbers<[1], [0], [0], [1], [0, 0, 1, 1], [], []>} : vector<128x8xbf16>, vector<8x16xbf16>, vector<128x16xf32> -> vector<128x16xf32>
    %c0_3 = arith.constant 0 : index
    %c0_4 = arith.constant 0 : index
    %3 = vector.load %arg3[%c0_3, %c0_4] : memref<1x16xf32, #tpu.memory_space<vmem>>, vector<1x16xf32>
    %4 = vector.broadcast %3 : vector<1x16xf32> to vector<128x16xf32>
    %5 = arith.addf %2, %4 : vector<128x16xf32>
    %cst_5 = arith.constant 0.000000e+00 : f32
    %6 = vector.broadcast %cst_5 : f32 to vector<128x16xf32>
    %7 = arith.maximumf %5, %6 : vector<128x16xf32>
    %8 = arith.truncf %7 : vector<128x16xf32> to vector<128x16xbf16>
    %9 = vector.extract_strided_slice %8 {offsets = [0, 0], sizes = [126, 16], strides = [1, 1]} : vector<128x16xbf16> to vector<126x16xbf16>
    %10 = vector.extract_strided_slice %8 {offsets = [1, 0], sizes = [126, 16], strides = [1, 1]} : vector<128x16xbf16> to vector<126x16xbf16>
    %11 = vector.extract_strided_slice %8 {offsets = [2, 0], sizes = [126, 16], strides = [1, 1]} : vector<128x16xbf16> to vector<126x16xbf16>
    %12 = tpu.concatenate %9, %10, %11 in 1 : vector<126x16xbf16>, vector<126x16xbf16>, vector<126x16xbf16> -> vector<126x48xbf16>
    %c0_6 = arith.constant 0 : index
    %c0_7 = arith.constant 0 : index
    %13 = vector.load %arg4[%c0_6, %c0_7] : memref<48x16xbf16, #tpu.memory_space<vmem>>, vector<48x16xbf16>
    %cst_8 = arith.constant dense<0.000000e+00> : vector<126x16xf32>
    %14 = tpu.matmul %12, %13, %cst_8 {dimension_numbers = #tpu.dot_dimension_numbers<[1], [0], [0], [1], [0, 0, 1, 1], [], []>} : vector<126x48xbf16>, vector<48x16xbf16>, vector<126x16xf32> -> vector<126x16xf32>
    %c0_9 = arith.constant 0 : index
    %c0_10 = arith.constant 0 : index
    %15 = vector.load %arg5[%c0_9, %c0_10] : memref<1x16xf32, #tpu.memory_space<vmem>>, vector<1x16xf32>
    %16 = vector.broadcast %15 : vector<1x16xf32> to vector<126x16xf32>
    %17 = arith.addf %14, %16 : vector<126x16xf32>
    %cst_11 = arith.constant 0.000000e+00 : f32
    %18 = vector.broadcast %cst_11 : f32 to vector<126x16xf32>
    %19 = arith.maximumf %17, %18 : vector<126x16xf32>
    %c0_12 = arith.constant 0 : index
    %c0_13 = arith.constant 0 : index
    %20 = vector.load %arg6[%c0_12, %c0_13] : memref<1x16xf32, #tpu.memory_space<vmem>>, vector<1x16xf32>
    %21 = vector.broadcast %20 : vector<1x16xf32> to vector<126x16xf32>
    %22 = arith.mulf %19, %21 : vector<126x16xf32>
    %c0_14 = arith.constant 0 : index
    %c0_15 = arith.constant 0 : index
    %23 = vector.load %arg7[%c0_14, %c0_15] : memref<1x16xf32, #tpu.memory_space<vmem>>, vector<1x16xf32>
    %24 = vector.broadcast %23 : vector<1x16xf32> to vector<126x16xf32>
    %25 = arith.addf %22, %24 : vector<126x16xf32>
    %26 = arith.truncf %25 : vector<126x16xf32> to vector<126x16xbf16>
    %c0_16 = arith.constant 0 : index
    %c0_17 = arith.constant 0 : index
    %27 = vector.load %arg8[%c0_16, %c0_17] : memref<16x32xbf16, #tpu.memory_space<vmem>>, vector<16x32xbf16>
    %cst_18 = arith.constant dense<0.000000e+00> : vector<126x32xf32>
    %28 = tpu.matmul %26, %27, %cst_18 {dimension_numbers = #tpu.dot_dimension_numbers<[1], [0], [0], [1], [0, 0, 1, 1], [], []>} : vector<126x16xbf16>, vector<16x32xbf16>, vector<126x32xf32> -> vector<126x32xf32>
    %c0_19 = arith.constant 0 : index
    %c0_20 = arith.constant 0 : index
    %29 = vector.load %arg9[%c0_19, %c0_20] : memref<1x32xf32, #tpu.memory_space<vmem>>, vector<1x32xf32>
    %30 = vector.broadcast %29 : vector<1x32xf32> to vector<126x32xf32>
    %31 = arith.addf %28, %30 : vector<126x32xf32>
    %cst_21 = arith.constant 0.000000e+00 : f32
    %32 = vector.broadcast %cst_21 : f32 to vector<126x32xf32>
    %33 = arith.maximumf %31, %32 : vector<126x32xf32>
    %34 = arith.truncf %33 : vector<126x32xf32> to vector<126x32xbf16>
    %35 = vector.extract_strided_slice %34 {offsets = [0, 0], sizes = [124, 32], strides = [1, 1]} : vector<126x32xbf16> to vector<124x32xbf16>
    %36 = vector.extract_strided_slice %34 {offsets = [1, 0], sizes = [124, 32], strides = [1, 1]} : vector<126x32xbf16> to vector<124x32xbf16>
    %37 = vector.extract_strided_slice %34 {offsets = [2, 0], sizes = [124, 32], strides = [1, 1]} : vector<126x32xbf16> to vector<124x32xbf16>
    %38 = tpu.concatenate %35, %36, %37 in 1 : vector<124x32xbf16>, vector<124x32xbf16>, vector<124x32xbf16> -> vector<124x96xbf16>
    %c0_22 = arith.constant 0 : index
    %c0_23 = arith.constant 0 : index
    %39 = vector.load %arg10[%c0_22, %c0_23] : memref<96x32xbf16, #tpu.memory_space<vmem>>, vector<96x32xbf16>
    %cst_24 = arith.constant dense<0.000000e+00> : vector<124x32xf32>
    %40 = tpu.matmul %38, %39, %cst_24 {dimension_numbers = #tpu.dot_dimension_numbers<[1], [0], [0], [1], [0, 0, 1, 1], [], []>} : vector<124x96xbf16>, vector<96x32xbf16>, vector<124x32xf32> -> vector<124x32xf32>
    %c0_25 = arith.constant 0 : index
    %c0_26 = arith.constant 0 : index
    %41 = vector.load %arg11[%c0_25, %c0_26] : memref<1x32xf32, #tpu.memory_space<vmem>>, vector<1x32xf32>
    %42 = vector.broadcast %41 : vector<1x32xf32> to vector<124x32xf32>
    %43 = arith.addf %40, %42 : vector<124x32xf32>
    %cst_27 = arith.constant 0.000000e+00 : f32
    %44 = vector.broadcast %cst_27 : f32 to vector<124x32xf32>
    %45 = arith.maximumf %43, %44 : vector<124x32xf32>
    %c0_28 = arith.constant 0 : index
    %c0_29 = arith.constant 0 : index
    %46 = vector.load %arg12[%c0_28, %c0_29] : memref<1x32xf32, #tpu.memory_space<vmem>>, vector<1x32xf32>
    %47 = vector.broadcast %46 : vector<1x32xf32> to vector<124x32xf32>
    %48 = arith.mulf %45, %47 : vector<124x32xf32>
    %c0_30 = arith.constant 0 : index
    %c0_31 = arith.constant 0 : index
    %49 = vector.load %arg13[%c0_30, %c0_31] : memref<1x32xf32, #tpu.memory_space<vmem>>, vector<1x32xf32>
    %50 = vector.broadcast %49 : vector<1x32xf32> to vector<124x32xf32>
    %51 = arith.addf %48, %50 : vector<124x32xf32>
    %52 = arith.truncf %51 : vector<124x32xf32> to vector<124x32xbf16>
    %c0_32 = arith.constant 0 : index
    %c0_33 = arith.constant 0 : index
    %53 = vector.load %arg14[%c0_32, %c0_33] : memref<32x32xbf16, #tpu.memory_space<vmem>>, vector<32x32xbf16>
    %cst_34 = arith.constant dense<0.000000e+00> : vector<124x32xf32>
    %54 = tpu.matmul %52, %53, %cst_34 {dimension_numbers = #tpu.dot_dimension_numbers<[1], [0], [0], [1], [0, 0, 1, 1], [], []>} : vector<124x32xbf16>, vector<32x32xbf16>, vector<124x32xf32> -> vector<124x32xf32>
    %c0_35 = arith.constant 0 : index
    %c0_36 = arith.constant 0 : index
    %55 = vector.load %arg15[%c0_35, %c0_36] : memref<1x32xf32, #tpu.memory_space<vmem>>, vector<1x32xf32>
    %56 = vector.broadcast %55 : vector<1x32xf32> to vector<124x32xf32>
    %57 = arith.addf %54, %56 : vector<124x32xf32>
    %cst_37 = arith.constant 0.000000e+00 : f32
    %58 = vector.broadcast %cst_37 : f32 to vector<124x32xf32>
    %59 = arith.maximumf %57, %58 : vector<124x32xf32>
    %60 = arith.truncf %59 : vector<124x32xf32> to vector<124x32xbf16>
    %61 = vector.extract_strided_slice %60 {offsets = [0, 0], sizes = [120, 32], strides = [1, 1]} : vector<124x32xbf16> to vector<120x32xbf16>
    %62 = vector.extract_strided_slice %60 {offsets = [2, 0], sizes = [120, 32], strides = [1, 1]} : vector<124x32xbf16> to vector<120x32xbf16>
    %63 = vector.extract_strided_slice %60 {offsets = [4, 0], sizes = [120, 32], strides = [1, 1]} : vector<124x32xbf16> to vector<120x32xbf16>
    %64 = tpu.concatenate %61, %62, %63 in 1 : vector<120x32xbf16>, vector<120x32xbf16>, vector<120x32xbf16> -> vector<120x96xbf16>
    %c0_38 = arith.constant 0 : index
    %c0_39 = arith.constant 0 : index
    %65 = vector.load %arg16[%c0_38, %c0_39] : memref<96x32xbf16, #tpu.memory_space<vmem>>, vector<96x32xbf16>
    %cst_40 = arith.constant dense<0.000000e+00> : vector<120x32xf32>
    %66 = tpu.matmul %64, %65, %cst_40 {dimension_numbers = #tpu.dot_dimension_numbers<[1], [0], [0], [1], [0, 0, 1, 1], [], []>} : vector<120x96xbf16>, vector<96x32xbf16>, vector<120x32xf32> -> vector<120x32xf32>
    %c0_41 = arith.constant 0 : index
    %c0_42 = arith.constant 0 : index
    %67 = vector.load %arg17[%c0_41, %c0_42] : memref<1x32xf32, #tpu.memory_space<vmem>>, vector<1x32xf32>
    %68 = vector.broadcast %67 : vector<1x32xf32> to vector<120x32xf32>
    %69 = arith.addf %66, %68 : vector<120x32xf32>
    %cst_43 = arith.constant 0.000000e+00 : f32
    %70 = vector.broadcast %cst_43 : f32 to vector<120x32xf32>
    %71 = arith.maximumf %69, %70 : vector<120x32xf32>
    %c0_44 = arith.constant 0 : index
    %c0_45 = arith.constant 0 : index
    %72 = vector.load %arg18[%c0_44, %c0_45] : memref<1x32xf32, #tpu.memory_space<vmem>>, vector<1x32xf32>
    %73 = vector.broadcast %72 : vector<1x32xf32> to vector<120x32xf32>
    %74 = arith.mulf %71, %73 : vector<120x32xf32>
    %c0_46 = arith.constant 0 : index
    %c0_47 = arith.constant 0 : index
    %75 = vector.load %arg19[%c0_46, %c0_47] : memref<1x32xf32, #tpu.memory_space<vmem>>, vector<1x32xf32>
    %76 = vector.broadcast %75 : vector<1x32xf32> to vector<120x32xf32>
    %77 = arith.addf %74, %76 : vector<120x32xf32>
    %c0_48 = arith.constant 0 : index
    %c0_49 = arith.constant 0 : index
    %78 = vector.load %arg21[%c0_48, %c0_49] : memref<128x32xf32, #tpu.memory_space<vmem>>, vector<120x32xf32>
    tpu.vector_store %arg21[%c0_48, %c0_49], %77 {strides = array<i32>} : memref<128x32xf32, #tpu.memory_space<vmem>>, vector<120x32xf32>,
    %cst_50 = arith.constant 0.000000e+00 : f32
    %79 = vector.broadcast %cst_50 : f32 to vector<8x32xf32>
    %c120 = arith.constant 120 : index
    %c0_51 = arith.constant 0 : index
    %80 = vector.load %arg21[%c120, %c0_51] : memref<128x32xf32, #tpu.memory_space<vmem>>, vector<8x32xf32>
    tpu.vector_store %arg21[%c120, %c0_51], %79 {strides = array<i32>} : memref<128x32xf32, #tpu.memory_space<vmem>>, vector<8x32xf32>,
    %c0_52 = arith.constant 0 : index
    %c0_53 = arith.constant 0 : index
    %81 = tpu.strided_load %arg21[%c0_52, %c0_53] {strides = array<i32: 2, 1>} : memref<128x32xf32, #tpu.memory_space<vmem>>, vector<64x32xf32>
    %82 = vector.extract_strided_slice %81 {offsets = [0, 0], sizes = [64, 16], strides = [1, 1]} : vector<64x32xf32> to vector<64x16xf32>
    %83 = vector.extract_strided_slice %81 {offsets = [0, 16], sizes = [64, 16], strides = [1, 1]} : vector<64x32xf32> to vector<64x16xf32>
    %84 = arith.maximumf %82, %83 : vector<64x16xf32>
    %c0_54 = arith.constant 0 : index
    %c0_55 = arith.constant 0 : index
    %85 = vector.load %arg20[%c0_54, %c0_55] : memref<64x16xf32, #tpu.memory_space<vmem>>, vector<64x16xf32>
    tpu.vector_store %arg20[%c0_54, %c0_55], %84 {strides = array<i32>} : memref<64x16xf32, #tpu.memory_space<vmem>>, vector<64x16xf32>,
    return
  }
  func.func @transform_0(%arg0: i32) -> (i32, i32) {
    %c0_i32 = arith.constant 0 : i32
    %c0_i32_0 = arith.constant 0 : i32
    return %arg0, %c0_i32 : i32, i32
  }
  func.func @transform_1(%arg0: i32) -> (i32, i32) {
    %c0_i32 = arith.constant 0 : i32
    %c0_i32_0 = arith.constant 0 : i32
    %c0_i32_1 = arith.constant 0 : i32
    return %c0_i32, %c0_i32_0 : i32, i32
  }
  func.func @transform_2(%arg0: i32) -> (i32, i32) {
    %c0_i32 = arith.constant 0 : i32
    %c0_i32_0 = arith.constant 0 : i32
    %c0_i32_1 = arith.constant 0 : i32
    return %c0_i32, %c0_i32_0 : i32, i32
  }
  func.func @transform_3(%arg0: i32) -> (i32, i32) {
    %c0_i32 = arith.constant 0 : i32
    %c0_i32_0 = arith.constant 0 : i32
    %c0_i32_1 = arith.constant 0 : i32
    return %c0_i32, %c0_i32_0 : i32, i32
  }
  func.func @transform_4(%arg0: i32) -> (i32, i32) {
    %c0_i32 = arith.constant 0 : i32
    %c0_i32_0 = arith.constant 0 : i32
    %c0_i32_1 = arith.constant 0 : i32
    return %c0_i32, %c0_i32_0 : i32, i32
  }
  func.func @transform_5(%arg0: i32) -> (i32, i32) {
    %c0_i32 = arith.constant 0 : i32
    %c0_i32_0 = arith.constant 0 : i32
    %c0_i32_1 = arith.constant 0 : i32
    return %c0_i32, %c0_i32_0 : i32, i32
  }
  func.func @transform_6(%arg0: i32) -> (i32, i32) {
    %c0_i32 = arith.constant 0 : i32
    %c0_i32_0 = arith.constant 0 : i32
    %c0_i32_1 = arith.constant 0 : i32
    return %c0_i32, %c0_i32_0 : i32, i32
  }
  func.func @transform_7(%arg0: i32) -> (i32, i32) {
    %c0_i32 = arith.constant 0 : i32
    %c0_i32_0 = arith.constant 0 : i32
    %c0_i32_1 = arith.constant 0 : i32
    return %c0_i32, %c0_i32_0 : i32, i32
  }
  func.func @transform_8(%arg0: i32) -> (i32, i32) {
    %c0_i32 = arith.constant 0 : i32
    %c0_i32_0 = arith.constant 0 : i32
    %c0_i32_1 = arith.constant 0 : i32
    return %c0_i32, %c0_i32_0 : i32, i32
  }
  func.func @transform_9(%arg0: i32) -> (i32, i32) {
    %c0_i32 = arith.constant 0 : i32
    %c0_i32_0 = arith.constant 0 : i32
    %c0_i32_1 = arith.constant 0 : i32
    return %c0_i32, %c0_i32_0 : i32, i32
  }
  func.func @transform_10(%arg0: i32) -> (i32, i32) {
    %c0_i32 = arith.constant 0 : i32
    %c0_i32_0 = arith.constant 0 : i32
    %c0_i32_1 = arith.constant 0 : i32
    return %c0_i32, %c0_i32_0 : i32, i32
  }
  func.func @transform_11(%arg0: i32) -> (i32, i32) {
    %c0_i32 = arith.constant 0 : i32
    %c0_i32_0 = arith.constant 0 : i32
    %c0_i32_1 = arith.constant 0 : i32
    return %c0_i32, %c0_i32_0 : i32, i32
  }
  func.func @transform_12(%arg0: i32) -> (i32, i32) {
    %c0_i32 = arith.constant 0 : i32
    %c0_i32_0 = arith.constant 0 : i32
    %c0_i32_1 = arith.constant 0 : i32
    return %c0_i32, %c0_i32_0 : i32, i32
  }
  func.func @transform_13(%arg0: i32) -> (i32, i32) {
    %c0_i32 = arith.constant 0 : i32
    %c0_i32_0 = arith.constant 0 : i32
    %c0_i32_1 = arith.constant 0 : i32
    return %c0_i32, %c0_i32_0 : i32, i32
  }
  func.func @transform_14(%arg0: i32) -> (i32, i32) {
    %c0_i32 = arith.constant 0 : i32
    %c0_i32_0 = arith.constant 0 : i32
    %c0_i32_1 = arith.constant 0 : i32
    return %c0_i32, %c0_i32_0 : i32, i32
  }
  func.func @transform_15(%arg0: i32) -> (i32, i32) {
    %c0_i32 = arith.constant 0 : i32
    %c0_i32_0 = arith.constant 0 : i32
    %c0_i32_1 = arith.constant 0 : i32
    return %c0_i32, %c0_i32_0 : i32, i32
  }
  func.func @transform_16(%arg0: i32) -> (i32, i32) {
    %c0_i32 = arith.constant 0 : i32
    %c0_i32_0 = arith.constant 0 : i32
    %c0_i32_1 = arith.constant 0 : i32
    return %c0_i32, %c0_i32_0 : i32, i32
  }
  func.func @transform_17(%arg0: i32) -> (i32, i32) {
    %c0_i32 = arith.constant 0 : i32
    %c0_i32_0 = arith.constant 0 : i32
    %c0_i32_1 = arith.constant 0 : i32
    return %c0_i32, %c0_i32_0 : i32, i32
  }
  func.func @transform_18(%arg0: i32) -> (i32, i32) {
    %c0_i32 = arith.constant 0 : i32
    %c0_i32_0 = arith.constant 0 : i32
    %c0_i32_1 = arith.constant 0 : i32
    return %c0_i32, %c0_i32_0 : i32, i32
  }
  func.func @transform_19(%arg0: i32) -> (i32, i32) {
    %c0_i32 = arith.constant 0 : i32
    %c0_i32_0 = arith.constant 0 : i32
    return %arg0, %c0_i32 : i32, i32
  }
}

</mosaic_0001>

<llo_original>
// kernel: tpu_custom_call.1
$region0: #{tpu_custom_call.1}
  #allocation0 [shape = 'u32[]', space=smem, size = 0x4, offset = 0x4, fixed_abs, tag = 'smem constant byte address 0x4 - core index']
  #allocation1 [shape = 'u32[144,128]{1,0:T(1,128)}', space=vmem, size = 0x12000, scoped, tag = 'internal scratch']
  #allocation2 [shape = 'f32[128,32]{1,0:T(8,128)}', space=vmem, size = 0x10000, scoped, tag = 'scratch operand']
  %s0 = inlined_call_operand.vmem [shape: bf16[256,8], index: 0, kind: input, shape index: {}]
  %s1 = inlined_call_operand.vmem [shape: bf16[8,16], index: 1, kind: input, shape index: {}]
  %s2 = inlined_call_operand.vmem [shape: f32[1,16], index: 2, kind: input, shape index: {}]
  %s3 = inlined_call_operand.vmem [shape: bf16[48,16], index: 3, kind: input, shape index: {}]
  %s4 = inlined_call_operand.vmem [shape: f32[1,16], index: 4, kind: input, shape index: {}]
  %s5 = inlined_call_operand.vmem [shape: f32[1,16], index: 5, kind: input, shape index: {}]
  %s6 = inlined_call_operand.vmem [shape: f32[1,16], index: 6, kind: input, shape index: {}]
  %s7 = inlined_call_operand.vmem [shape: bf16[16,32], index: 7, kind: input, shape index: {}]
  %s8 = inlined_call_operand.vmem [shape: f32[1,32], index: 8, kind: input, shape index: {}]
  %s9 = inlined_call_operand.vmem [shape: bf16[96,32], index: 9, kind: input, shape index: {}]
  %s10 = inlined_call_operand.vmem [shape: f32[1,32], index: 10, kind: input, shape index: {}]
  %s11 = inlined_call_operand.vmem [shape: f32[1,32], index: 11, kind: input, shape index: {}]
  %s12 = inlined_call_operand.vmem [shape: f32[1,32], index: 12, kind: input, shape index: {}]
  %s13 = inlined_call_operand.vmem [shape: bf16[32,32], index: 13, kind: input, shape index: {}]
  %s14 = inlined_call_operand.vmem [shape: f32[1,32], index: 14, kind: input, shape index: {}]
  %s15 = inlined_call_operand.vmem [shape: bf16[96,32], index: 15, kind: input, shape index: {}]
  %s16 = inlined_call_operand.vmem [shape: f32[1,32], index: 16, kind: input, shape index: {}]
  %s17 = inlined_call_operand.vmem [shape: f32[1,32], index: 17, kind: input, shape index: {}]
  %s18 = inlined_call_operand.vmem [shape: f32[1,32], index: 18, kind: input, shape index: {}]
  %s19 = inlined_call_operand.vmem [shape: f32[128,16], index: 19, kind: output, shape index: {}]
  %s20 = sld [smem:[#allocation0]]
  $region109: #{tpu_custom_call.1} parent=0
    _
  %s22 = ssub.s32 1, %s20
  %s23 = scalar_select 0, %s22, %s20
  loop: start=0, step=1, limit=4
  $region2: #{tpu_custom_call.1} parent=0 // loop_pre_header
    _
  $region3: #{tpu_custom_call.1} parent=0 // loop_header
    %s25 = sphi 0, %s29
    %p26 = scmp.ge.s32.totalorder %s25, 4
    %s35 = sphi 0, %s37
    %s38 = sphi 0, %s35
    %s39 = sphi 0, %s38
    %s55 = sphi 0, %s39
    %s59 = sphi 0, %s59
    %s61 = sphi 0, %s59
    %s62 = sphi 0, %s61
    %s76 = sphi 0, %s62
    %s80 = sphi 0, %s80
    %s82 = sphi 0, %s80
    %s83 = sphi 0, %s82
    %s97 = sphi 0, %s83
    %s101 = sphi 0, %s101
    %s103 = sphi 0, %s101
    %s104 = sphi 0, %s103
    %s118 = sphi 0, %s104
    %s122 = sphi 0, %s122
    %s124 = sphi 0, %s122
    %s125 = sphi 0, %s124
    %s139 = sphi 0, %s125
    %s143 = sphi 0, %s143
    %s145 = sphi 0, %s143
    %s146 = sphi 0, %s145
    %s160 = sphi 0, %s146
    %s164 = sphi 0, %s164
    %s166 = sphi 0, %s164
    %s167 = sphi 0, %s166
    %s181 = sphi 0, %s167
    %s185 = sphi 0, %s185
    %s187 = sphi 0, %s185
    %s188 = sphi 0, %s187
    %s202 = sphi 0, %s188
    %s206 = sphi 0, %s206
    %s208 = sphi 0, %s206
    %s209 = sphi 0, %s208
    %s223 = sphi 0, %s209
    %s227 = sphi 0, %s227
    %s229 = sphi 0, %s227
    %s230 = sphi 0, %s229
    %s244 = sphi 0, %s230
    %s248 = sphi 0, %s248
    %s250 = sphi 0, %s248
    %s251 = sphi 0, %s250
    %s265 = sphi 0, %s251
    %s269 = sphi 0, %s269
    %s271 = sphi 0, %s269
    %s272 = sphi 0, %s271
    %s286 = sphi 0, %s272
    %s290 = sphi 0, %s290
    %s292 = sphi 0, %s290
    %s293 = sphi 0, %s292
    %s307 = sphi 0, %s293
    %s311 = sphi 0, %s311
    %s313 = sphi 0, %s311
    %s314 = sphi 0, %s313
    %s328 = sphi 0, %s314
    %s332 = sphi 0, %s332
    %s334 = sphi 0, %s332
    %s335 = sphi 0, %s334
    %s349 = sphi 0, %s335
    %s353 = sphi 0, %s353
    %s355 = sphi 0, %s353
    %s356 = sphi 0, %s355
    %s370 = sphi 0, %s356
    %s374 = sphi 0, %s374
    %s376 = sphi 0, %s374
    %s377 = sphi 0, %s376
    %s391 = sphi 0, %s377
    %s395 = sphi 0, %s395
    %s397 = sphi 0, %s395
    %s398 = sphi 0, %s397
    %s412 = sphi 0, %s398
    %s416 = sphi 0, %s416
    %s418 = sphi 0, %s416
    %s419 = sphi 0, %s418
    %s433 = sphi 0, %s419
    %s439 = sphi 0, %s441
    %s442 = sphi 0, %s439
    %s443 = sphi 0, %s442
    %s459 = sphi 0, %s443
  $region4: #{tpu_custom_call.1} parent=0 // loop_header_branch
    %28 = sbr.rel (%p26) target = $region8
  $region5: #{tpu_custom_call.1} parent=0 // loop_body
    %s30 = ssub.s32 %s25, 1
    %s31 = ssub.s32 %s25, 2
    %s32 = sadd.s32 %s25, 1
    %s33 = ssub.s32 %s25, %s32
    %p34 = scmp.eq.s32.totalorder %s33, 0
    %s36 = sadd.s32 %s35, 1
    %s37 = scalar_select %p34, %s35, %s36
    %p40 = pneg %p34
    %p41 = scmp.eq.s32.totalorder %s25, 1
    %p42 = por %p40, %p41
    %p43 = scmp.ne.s32.totalorder %s35, %s38
    %p44 = scmp.eq.s32.totalorder %s25, 0
    %p45 = por %p43, %p44
    %p46 = scmp.ne.s32.totalorder %s35, %s38
    %p47 = scmp.eq.s32.totalorder %s30, 1
    %p48 = por %p46, %p47
    %p49 = scmp.ne.s32.totalorder %s38, %s39
    %p50 = scmp.eq.s32.totalorder %s30, 0
    %p51 = por %p49, %p50
    %p52 = scmp.ne.s32.totalorder %s38, %s39
    %p53 = scmp.eq.s32.totalorder %s31, 1
    %p54 = por %p52, %p53
    %p56 = scmp.ne.s32.totalorder %s39, %s55
    %p57 = scmp.eq.s32.totalorder %s31, 0
    %p58 = por %p56, %p57
    %s60 = sadd.s32 %s59, 1
    %p63 = scmp.eq.s32.totalorder %s25, 1
    %p64 = scmp.ne.s32.totalorder %s59, %s61
    %p65 = scmp.eq.s32.totalorder %s25, 0
    %p66 = por %p64, %p65
    %p67 = scmp.ne.s32.totalorder %s59, %s61
    %p68 = scmp.eq.s32.totalorder %s30, 1
    %p69 = por %p67, %p68
    %p70 = scmp.ne.s32.totalorder %s61, %s62
    %p71 = scmp.eq.s32.totalorder %s30, 0
    %p72 = por %p70, %p71
    %p73 = scmp.ne.s32.totalorder %s61, %s62
    %p74 = scmp.eq.s32.totalorder %s31, 1
    %p75 = por %p73, %p74
    %p77 = scmp.ne.s32.totalorder %s62, %s76
    %p78 = scmp.eq.s32.totalorder %s31, 0
    %p79 = por %p77, %p78
    %s81 = sadd.s32 %s80, 1
    %p84 = scmp.eq.s32.totalorder %s25, 1
    %p85 = scmp.ne.s32.totalorder %s80, %s82
    %p86 = scmp.eq.s32.totalorder %s25, 0
    %p87 = por %p85, %p86
    %p88 = scmp.ne.s32.totalorder %s80, %s82
    %p89 = scmp.eq.s32.totalorder %s30, 1
    %p90 = por %p88, %p89
    %p91 = scmp.ne.s32.totalorder %s82, %s83
    %p92 = scmp.eq.s32.totalorder %s30, 0
    %p93 = por %p91, %p92
    %p94 = scmp.ne.s32.totalorder %s82, %s83
    %p95 = scmp.eq.s32.totalorder %s31, 1
    %p96 = por %p94, %p95
    %p98 = scmp.ne.s32.totalorder %s83, %s97
    %p99 = scmp.eq.s32.totalorder %s31, 0
    %p100 = por %p98, %p99
    %s102 = sadd.s32 %s101, 1
    %p105 = scmp.eq.s32.totalorder %s25, 1
    %p106 = scmp.ne.s32.totalorder %s101, %s103
    %p107 = scmp.eq.s32.totalorder %s25, 0
    %p108 = por %p106, %p107
    %p109 = scmp.ne.s32.totalorder %s101, %s103
    %p110 = scmp.eq.s32.totalorder %s30, 1
    %p111 = por %p109, %p110
    %p112 = scmp.ne.s32.totalorder %s103, %s104
    %p113 = scmp.eq.s32.totalorder %s30, 0
    %p114 = por %p112, %p113
    %p115 = scmp.ne.s32.totalorder %s103, %s104
    %p116 = scmp.eq.s32.totalorder %s31, 1
    %p117 = por %p115, %p116
    %p119 = scmp.ne.s32.totalorder %s104, %s118
    %p120 = scmp.eq.s32.totalorder %s31, 0
    %p121 = por %p119, %p120
    %s123 = sadd.s32 %s122, 1
    %p126 = scmp.eq.s32.totalorder %s25, 1
    %p127 = scmp.ne.s32.totalorder %s122, %s124
    %p128 = scmp.eq.s32.totalorder %s25, 0
    %p129 = por %p127, %p128
    %p130 = scmp.ne.s32.totalorder %s122, %s124
    %p131 = scmp.eq.s32.totalorder %s30, 1
    %p132 = por %p130, %p131
    %p133 = scmp.ne.s32.totalorder %s124, %s125
    %p134 = scmp.eq.s32.totalorder %s30, 0
    %p135 = por %p133, %p134
    %p136 = scmp.ne.s32.totalorder %s124, %s125
    %p137 = scmp.eq.s32.totalorder %s31, 1
    %p138 = por %p136, %p137
    %p140 = scmp.ne.s32.totalorder %s125, %s139
    %p141 = scmp.eq.s32.totalorder %s31, 0
    %p142 = por %p140, %p141
    %s144 = sadd.s32 %s143, 1
    %p147 = scmp.eq.s32.totalorder %s25, 1
    %p148 = scmp.ne.s32.totalorder %s143, %s145
    %p149 = scmp.eq.s32.totalorder %s25, 0
    %p150 = por %p148, %p149
    %p151 = scmp.ne.s32.totalorder %s143, %s145
    %p152 = scmp.eq.s32.totalorder %s30, 1
    %p153 = por %p151, %p152
    %p154 = scmp.ne.s32.totalorder %s145, %s146
    %p155 = scmp.eq.s32.totalorder %s30, 0
    %p156 = por %p154, %p155
    %p157 = scmp.ne.s32.totalorder %s145, %s146
    %p158 = scmp.eq.s32.totalorder %s31, 1
    %p159 = por %p157, %p158
    %p161 = scmp.ne.s32.totalorder %s146, %s160
    %p162 = scmp.eq.s32.totalorder %s31, 0
    %p163 = por %p161, %p162
    %s165 = sadd.s32 %s164, 1
    %p168 = scmp.eq.s32.totalorder %s25, 1
    %p169 = scmp.ne.s32.totalorder %s164, %s166
    %p170 = scmp.eq.s32.totalorder %s25, 0
    %p171 = por %p169, %p170
    %p172 = scmp.ne.s32.totalorder %s164, %s166
    %p173 = scmp.eq.s32.totalorder %s30, 1
    %p174 = por %p172, %p173
    %p175 = scmp.ne.s32.totalorder %s166, %s167
    %p176 = scmp.eq.s32.totalorder %s30, 0
    %p177 = por %p175, %p176
    %p178 = scmp.ne.s32.totalorder %s166, %s167
    %p179 = scmp.eq.s32.totalorder %s31, 1
    %p180 = por %p178, %p179
    %p182 = scmp.ne.s32.totalorder %s167, %s181
    %p183 = scmp.eq.s32.totalorder %s31, 0
    %p184 = por %p182, %p183
    %s186 = sadd.s32 %s185, 1
    %p189 = scmp.eq.s32.totalorder %s25, 1
    %p190 = scmp.ne.s32.totalorder %s185, %s187
    %p191 = scmp.eq.s32.totalorder %s25, 0
    %p192 = por %p190, %p191
    %p193 = scmp.ne.s32.totalorder %s185, %s187
    %p194 = scmp.eq.s32.totalorder %s30, 1
    %p195 = por %p193, %p194
    %p196 = scmp.ne.s32.totalorder %s187, %s188
    %p197 = scmp.eq.s32.totalorder %s30, 0
    %p198 = por %p196, %p197
    %p199 = scmp.ne.s32.totalorder %s187, %s188
    %p200 = scmp.eq.s32.totalorder %s31, 1
    %p201 = por %p199, %p200
    %p203 = scmp.ne.s32.totalorder %s188, %s202
    %p204 = scmp.eq.s32.totalorder %s31, 0
    %p205 = por %p203, %p204
    %s207 = sadd.s32 %s206, 1
    %p210 = scmp.eq.s32.totalorder %s25, 1
    %p211 = scmp.ne.s32.totalorder %s206, %s208
    %p212 = scmp.eq.s32.totalorder %s25, 0
    %p213 = por %p211, %p212
    %p214 = scmp.ne.s32.totalorder %s206, %s208
    %p215 = scmp.eq.s32.totalorder %s30, 1
    %p216 = por %p214, %p215
    %p217 = scmp.ne.s32.totalorder %s208, %s209
    %p218 = scmp.eq.s32.totalorder %s30, 0
    %p219 = por %p217, %p218
    %p220 = scmp.ne.s32.totalorder %s208, %s209
    %p221 = scmp.eq.s32.totalorder %s31, 1
    %p222 = por %p220, %p221
    %p224 = scmp.ne.s32.totalorder %s209, %s223
    %p225 = scmp.eq.s32.totalorder %s31, 0
    %p226 = por %p224, %p225
    %s228 = sadd.s32 %s227, 1
    %p231 = scmp.eq.s32.totalorder %s25, 1
    %p232 = scmp.ne.s32.totalorder %s227, %s229
    %p233 = scmp.eq.s32.totalorder %s25, 0
    %p234 = por %p232, %p233
    %p235 = scmp.ne.s32.totalorder %s227, %s229
    %p236 = scmp.eq.s32.totalorder %s30, 1
    %p237 = por %p235, %p236
    %p238 = scmp.ne.s32.totalorder %s229, %s230
    %p239 = scmp.eq.s32.totalorder %s30, 0
    %p240 = por %p238, %p239
    %p241 = scmp.ne.s32.totalorder %s229, %s230
    %p242 = scmp.eq.s32.totalorder %s31, 1
    %p243 = por %p241, %p242
    %p245 = scmp.ne.s32.totalorder %s230, %s244
    %p246 = scmp.eq.s32.totalorder %s31, 0
    %p247 = por %p245, %p246
    %s249 = sadd.s32 %s248, 1
    %p252 = scmp.eq.s32.totalorder %s25, 1
    %p253 = scmp.ne.s32.totalorder %s248, %s250
    %p254 = scmp.eq.s32.totalorder %s25, 0
    %p255 = por %p253, %p254
    %p256 = scmp.ne.s32.totalorder %s248, %s250
    %p257 = scmp.eq.s32.totalorder %s30, 1
    %p258 = por %p256, %p257
    %p259 = scmp.ne.s32.totalorder %s250, %s251
    %p260 = scmp.eq.s32.totalorder %s30, 0
    %p261 = por %p259, %p260
    %p262 = scmp.ne.s32.totalorder %s250, %s251
    %p263 = scmp.eq.s32.totalorder %s31, 1
    %p264 = por %p262, %p263
    %p266 = scmp.ne.s32.totalorder %s251, %s265
    %p267 = scmp.eq.s32.totalorder %s31, 0
    %p268 = por %p266, %p267
    %s270 = sadd.s32 %s269, 1
    %p273 = scmp.eq.s32.totalorder %s25, 1
    %p274 = scmp.ne.s32.totalorder %s269, %s271
    %p275 = scmp.eq.s32.totalorder %s25, 0
    %p276 = por %p274, %p275
    %p277 = scmp.ne.s32.totalorder %s269, %s271
    %p278 = scmp.eq.s32.totalorder %s30, 1
    %p279 = por %p277, %p278
    %p280 = scmp.ne.s32.totalorder %s271, %s272
    %p281 = scmp.eq.s32.totalorder %s30, 0
    %p282 = por %p280, %p281
    %p283 = scmp.ne.s32.totalorder %s271, %s272
    %p284 = scmp.eq.s32.totalorder %s31, 1
    %p285 = por %p283, %p284
    %p287 = scmp.ne.s32.totalorder %s272, %s286
    %p288 = scmp.eq.s32.totalorder %s31, 0
    %p289 = por %p287, %p288
    %s291 = sadd.s32 %s290, 1
    %p294 = scmp.eq.s32.totalorder %s25, 1
    %p295 = scmp.ne.s32.totalorder %s290, %s292
    %p296 = scmp.eq.s32.totalorder %s25, 0
    %p297 = por %p295, %p296
    %p298 = scmp.ne.s32.totalorder %s290, %s292
    %p299 = scmp.eq.s32.totalorder %s30, 1
    %p300 = por %p298, %p299
    %p301 = scmp.ne.s32.totalorder %s292, %s293
    %p302 = scmp.eq.s32.totalorder %s30, 0
    %p303 = por %p301, %p302
    %p304 = scmp.ne.s32.totalorder %s292, %s293
    %p305 = scmp.eq.s32.totalorder %s31, 1
    %p306 = por %p304, %p305
    %p308 = scmp.ne.s32.totalorder %s293, %s307
    %p309 = scmp.eq.s32.totalorder %s31, 0
    %p310 = por %p308, %p309
    %s312 = sadd.s32 %s311, 1
    %p315 = scmp.eq.s32.totalorder %s25, 1
    %p316 = scmp.ne.s32.totalorder %s311, %s313
    %p317 = scmp.eq.s32.totalorder %s25, 0
    %p318 = por %p316, %p317
    %p319 = scmp.ne.s32.totalorder %s311, %s313
    %p320 = scmp.eq.s32.totalorder %s30, 1
    %p321 = por %p319, %p320
    %p322 = scmp.ne.s32.totalorder %s313, %s314
    %p323 = scmp.eq.s32.totalorder %s30, 0
    %p324 = por %p322, %p323
    %p325 = scmp.ne.s32.totalorder %s313, %s314
    %p326 = scmp.eq.s32.totalorder %s31, 1
    %p327 = por %p325, %p326
    %p329 = scmp.ne.s32.totalorder %s314, %s328
    %p330 = scmp.eq.s32.totalorder %s31, 0
    %p331 = por %p329, %p330
    %s333 = sadd.s32 %s332, 1
    %p336 = scmp.eq.s32.totalorder %s25, 1
    %p337 = scmp.ne.s32.totalorder %s332, %s334
    %p338 = scmp.eq.s32.totalorder %s25, 0
    %p339 = por %p337, %p338
    %p340 = scmp.ne.s32.totalorder %s332, %s334
    %p341 = scmp.eq.s32.totalorder %s30, 1
    %p342 = por %p340, %p341
    %p343 = scmp.ne.s32.totalorder %s334, %s335
    %p344 = scmp.eq.s32.totalorder %s30, 0
    %p345 = por %p343, %p344
    %p346 = scmp.ne.s32.totalorder %s334, %s335
    %p347 = scmp.eq.s32.totalorder %s31, 1
    %p348 = por %p346, %p347
    %p350 = scmp.ne.s32.totalorder %s335, %s349
    %p351 = scmp.eq.s32.totalorder %s31, 0
    %p352 = por %p350, %p351
    %s354 = sadd.s32 %s353, 1
    %p357 = scmp.eq.s32.totalorder %s25, 1
    %p358 = scmp.ne.s32.totalorder %s353, %s355
    %p359 = scmp.eq.s32.totalorder %s25, 0
    %p360 = por %p358, %p359
    %p361 = scmp.ne.s32.totalorder %s353, %s355
    %p362 = scmp.eq.s32.totalorder %s30, 1
    %p363 = por %p361, %p362
    %p364 = scmp.ne.s32.totalorder %s355, %s356
    %p365 = scmp.eq.s32.totalorder %s30, 0
    %p366 = por %p364, %p365
    %p367 = scmp.ne.s32.totalorder %s355, %s356
    %p368 = scmp.eq.s32.totalorder %s31, 1
    %p369 = por %p367, %p368
    %p371 = scmp.ne.s32.totalorder %s356, %s370
    %p372 = scmp.eq.s32.totalorder %s31, 0
    %p373 = por %p371, %p372
    %s375 = sadd.s32 %s374, 1
    %p378 = scmp.eq.s32.totalorder %s25, 1
    %p379 = scmp.ne.s32.totalorder %s374, %s376
    %p380 = scmp.eq.s32.totalorder %s25, 0
    %p381 = por %p379, %p380
    %p382 = scmp.ne.s32.totalorder %s374, %s376
    %p383 = scmp.eq.s32.totalorder %s30, 1
    %p384 = por %p382, %p383
    %p385 = scmp.ne.s32.totalorder %s376, %s377
    %p386 = scmp.eq.s32.totalorder %s30, 0
    %p387 = por %p385, %p386
    %p388 = scmp.ne.s32.totalorder %s376, %s377
    %p389 = scmp.eq.s32.totalorder %s31, 1
    %p390 = por %p388, %p389
    %p392 = scmp.ne.s32.totalorder %s377, %s391
    %p393 = scmp.eq.s32.totalorder %s31, 0
    %p394 = por %p392, %p393
    %s396 = sadd.s32 %s395, 1
    %p399 = scmp.eq.s32.totalorder %s25, 1
    %p400 = scmp.ne.s32.totalorder %s395, %s397
    %p401 = scmp.eq.s32.totalorder %s25, 0
    %p402 = por %p400, %p401
    %p403 = scmp.ne.s32.totalorder %s395, %s397
    %p404 = scmp.eq.s32.totalorder %s30, 1
    %p405 = por %p403, %p404
    %p406 = scmp.ne.s32.totalorder %s397, %s398
    %p407 = scmp.eq.s32.totalorder %s30, 0
    %p408 = por %p406, %p407
    %p409 = scmp.ne.s32.totalorder %s397, %s398
    %p410 = scmp.eq.s32.totalorder %s31, 1
    %p411 = por %p409, %p410
    %p413 = scmp.ne.s32.totalorder %s398, %s412
    %p414 = scmp.eq.s32.totalorder %s31, 0
    %p415 = por %p413, %p414
    %s417 = sadd.s32 %s416, 1
    %p420 = scmp.eq.s32.totalorder %s25, 1
    %p421 = scmp.ne.s32.totalorder %s416, %s418
    %p422 = scmp.eq.s32.totalorder %s25, 0
    %p423 = por %p421, %p422
    %p424 = scmp.ne.s32.totalorder %s416, %s418
    %p425 = scmp.eq.s32.totalorder %s30, 1
    %p426 = por %p424, %p425
    %p427 = scmp.ne.s32.totalorder %s418, %s419
    %p428 = scmp.eq.s32.totalorder %s30, 0
    %p429 = por %p427, %p428
    %p430 = scmp.ne.s32.totalorder %s418, %s419
    %p431 = scmp.eq.s32.totalorder %s31, 1
    %p432 = por %p430, %p431
    %p434 = scmp.ne.s32.totalorder %s419, %s433
    %p435 = scmp.eq.s32.totalorder %s31, 0
    %p436 = por %p434, %p435
    %s437 = ssub.s32 %s25, %s32
    %p438 = scmp.eq.s32.totalorder %s437, 0
    %s440 = sadd.s32 %s439, 1
    %s441 = scalar_select %p438, %s439, %s440
    %p444 = pneg %p438
    %p445 = scmp.eq.s32.totalorder %s25, 1
    %p446 = por %p444, %p445
    %p447 = scmp.ne.s32.totalorder %s439, %s442
    %p448 = scmp.eq.s32.totalorder %s25, 0
    %p449 = por %p447, %p448
    %p450 = scmp.ne.s32.totalorder %s439, %s442
    %p451 = scmp.eq.s32.totalorder %s30, 1
    %p452 = por %p450, %p451
    %p453 = scmp.ne.s32.totalorder %s442, %s443
    %p454 = scmp.eq.s32.totalorder %s30, 0
    %p455 = por %p453, %p454
    %p456 = scmp.ne.s32.totalorder %s442, %s443
    %p457 = scmp.eq.s32.totalorder %s31, 1
    %p458 = por %p456, %p457
    %p460 = scmp.ne.s32.totalorder %s443, %s459
    %p461 = scmp.eq.s32.totalorder %s31, 0
    %p462 = por %p460, %p461
    %p463 = scmp.le.s32.totalorder 1, %s25
    %p464 = scmp.lt.s32.totalorder %s25, 3
    %p465 = pnand %p463, %p464
    %p466 = pneg %p465
    // Predicated region
    $region9: #{tpu_custom_call.1} parent=5 // pred_check
      _
    $region10: #{tpu_custom_call.1} parent=5 // pred_check_branch
      %468 = sbr.rel (%p465) target = $region12
    $region11: #{tpu_custom_call.1} parent=5 // pred_region
      %s469 = ssub.s32 %s25, 1
      // Predicated region
      $region13: #{tpu_custom_call.1} parent=11 // pred_check
        %p470 = pneg %p72
      $region14: #{tpu_custom_call.1} parent=11 // pred_check_branch
        %472 = sbr.rel (%p470) target = $region16
      $region15: #{tpu_custom_call.1} parent=11 // pred_region
        _
      $region16: #{tpu_custom_call.1} parent=11 // pred_fallthru
        _
      // Predicated region
      $region17: #{tpu_custom_call.1} parent=11 // pred_check
        %p473 = pneg %p93
      $region18: #{tpu_custom_call.1} parent=11 // pred_check_branch
        %475 = sbr.rel (%p473) target = $region20
      $region19: #{tpu_custom_call.1} parent=11 // pred_region
        _
      $region20: #{tpu_custom_call.1} parent=11 // pred_fallthru
        _
      // Predicated region
      $region21: #{tpu_custom_call.1} parent=11 // pred_check
        %p476 = pneg %p114
      $region22: #{tpu_custom_call.1} parent=11 // pred_check_branch
        %478 = sbr.rel (%p476) target = $region24
      $region23: #{tpu_custom_call.1} parent=11 // pred_region
        _
      $region24: #{tpu_custom_call.1} parent=11 // pred_fallthru
        _
      // Predicated region
      $region25: #{tpu_custom_call.1} parent=11 // pred_check
        %p479 = pneg %p135
      $region26: #{tpu_custom_call.1} parent=11 // pred_check_branch
        %481 = sbr.rel (%p479) target = $region28
      $region27: #{tpu_custom_call.1} parent=11 // pred_region
        _
      $region28: #{tpu_custom_call.1} parent=11 // pred_fallthru
        _
      // Predicated region
      $region29: #{tpu_custom_call.1} parent=11 // pred_check
        %p482 = pneg %p156
      $region30: #{tpu_custom_call.1} parent=11 // pred_check_branch
        %484 = sbr.rel (%p482) target = $region32
      $region31: #{tpu_custom_call.1} parent=11 // pred_region
        _
      $region32: #{tpu_custom_call.1} parent=11 // pred_fallthru
        _
      // Predicated region
      $region33: #{tpu_custom_call.1} parent=11 // pred_check
        %p485 = pneg %p177
      $region34: #{tpu_custom_call.1} parent=11 // pred_check_branch
        %487 = sbr.rel (%p485) target = $region36
      $region35: #{tpu_custom_call.1} parent=11 // pred_region
        _
      $region36: #{tpu_custom_call.1} parent=11 // pred_fallthru
        _
      // Predicated region
      $region37: #{tpu_custom_call.1} parent=11 // pred_check
        %p488 = pneg %p198
      $region38: #{tpu_custom_call.1} parent=11 // pred_check_branch
        %490 = sbr.rel (%p488) target = $region40
      $region39: #{tpu_custom_call.1} parent=11 // pred_region
        _
      $region40: #{tpu_custom_call.1} parent=11 // pred_fallthru
        _
      // Predicated region
      $region41: #{tpu_custom_call.1} parent=11 // pred_check
        %p491 = pneg %p219
      $region42: #{tpu_custom_call.1} parent=11 // pred_check_branch
        %493 = sbr.rel (%p491) target = $region44
      $region43: #{tpu_custom_call.1} parent=11 // pred_region
        _
      $region44: #{tpu_custom_call.1} parent=11 // pred_fallthru
        _
      // Predicated region
      $region45: #{tpu_custom_call.1} parent=11 // pred_check
        %p494 = pneg %p240
      $region46: #{tpu_custom_call.1} parent=11 // pred_check_branch
        %496 = sbr.rel (%p494) target = $region48
      $region47: #{tpu_custom_call.1} parent=11 // pred_region
        _
      $region48: #{tpu_custom_call.1} parent=11 // pred_fallthru
        _
      // Predicated region
      $region49: #{tpu_custom_call.1} parent=11 // pred_check
        %p497 = pneg %p261
      $region50: #{tpu_custom_call.1} parent=11 // pred_check_branch
        %499 = sbr.rel (%p497) target = $region52
      $region51: #{tpu_custom_call.1} parent=11 // pred_region
        _
      $region52: #{tpu_custom_call.1} parent=11 // pred_fallthru
        _
      // Predicated region
      $region53: #{tpu_custom_call.1} parent=11 // pred_check
        %p500 = pneg %p282
      $region54: #{tpu_custom_call.1} parent=11 // pred_check_branch
        %502 = sbr.rel (%p500) target = $region56
      $region55: #{tpu_custom_call.1} parent=11 // pred_region
        _
      $region56: #{tpu_custom_call.1} parent=11 // pred_fallthru
        _
      // Predicated region
      $region57: #{tpu_custom_call.1} parent=11 // pred_check
        %p503 = pneg %p303
      $region58: #{tpu_custom_call.1} parent=11 // pred_check_branch
        %505 = sbr.rel (%p503) target = $region60
      $region59: #{tpu_custom_call.1} parent=11 // pred_region
        _
      $region60: #{tpu_custom_call.1} parent=11 // pred_fallthru
        _
      // Predicated region
      $region61: #{tpu_custom_call.1} parent=11 // pred_check
        %p506 = pneg %p324
      $region62: #{tpu_custom_call.1} parent=11 // pred_check_branch
        %508 = sbr.rel (%p506) target = $region64
      $region63: #{tpu_custom_call.1} parent=11 // pred_region
        _
      $region64: #{tpu_custom_call.1} parent=11 // pred_fallthru
        _
      // Predicated region
      $region65: #{tpu_custom_call.1} parent=11 // pred_check
        %p509 = pneg %p345
      $region66: #{tpu_custom_call.1} parent=11 // pred_check_branch
        %511 = sbr.rel (%p509) target = $region68
      $region67: #{tpu_custom_call.1} parent=11 // pred_region
        _
      $region68: #{tpu_custom_call.1} parent=11 // pred_fallthru
        _
      // Predicated region
      $region69: #{tpu_custom_call.1} parent=11 // pred_check
        %p512 = pneg %p366
      $region70: #{tpu_custom_call.1} parent=11 // pred_check_branch
        %514 = sbr.rel (%p512) target = $region72
      $region71: #{tpu_custom_call.1} parent=11 // pred_region
        _
      $region72: #{tpu_custom_call.1} parent=11 // pred_fallthru
        _
      // Predicated region
      $region73: #{tpu_custom_call.1} parent=11 // pred_check
        %p515 = pneg %p387
      $region74: #{tpu_custom_call.1} parent=11 // pred_check_branch
        %517 = sbr.rel (%p515) target = $region76
      $region75: #{tpu_custom_call.1} parent=11 // pred_region
        _
      $region76: #{tpu_custom_call.1} parent=11 // pred_fallthru
        _
      // Predicated region
      $region77: #{tpu_custom_call.1} parent=11 // pred_check
        %p518 = pneg %p408
      $region78: #{tpu_custom_call.1} parent=11 // pred_check_branch
        %520 = sbr.rel (%p518) target = $region80
      $region79: #{tpu_custom_call.1} parent=11 // pred_region
        _
      $region80: #{tpu_custom_call.1} parent=11 // pred_fallthru
        _
      // Predicated region
      $region81: #{tpu_custom_call.1} parent=11 // pred_check
        %p521 = pneg %p429
      $region82: #{tpu_custom_call.1} parent=11 // pred_check_branch
        %523 = sbr.rel (%p521) target = $region84
      $region83: #{tpu_custom_call.1} parent=11 // pred_region
        _
      $region84: #{tpu_custom_call.1} parent=11 // pred_fallthru
        _
    $region12: #{tpu_custom_call.1} parent=5 // pred_fallthru
      _
    %p524 = scmp.lt.s32.totalorder %s25, 2
    // Predicated region
    $region85: #{tpu_custom_call.1} parent=5 // pred_check
      %p525 = pneg %p524
    $region86: #{tpu_custom_call.1} parent=5 // pred_check_branch
      %527 = sbr.rel (%p525) target = $region88
    $region87: #{tpu_custom_call.1} parent=5 // pred_region
      // Predicated region
      $region89: #{tpu_custom_call.1} parent=87 // pred_check
        %p528 = pneg %p45
      $region90: #{tpu_custom_call.1} parent=87 // pred_check_branch
        %530 = sbr.rel (%p528) target = $region92
      $region91: #{tpu_custom_call.1} parent=87 // pred_region
        %s531 = smul.u32 16, %s25
        %p532 = scmp.lt.s32.totalorder %s531, 31
        %s533 = scalar_select %p532, %s531, 31
        %s534 = smul.addr %s533, 4
        %s535 = scalar_lea.vmem %s0, %s534
        %s536 = smul.u32 16, %s25
      $region92: #{tpu_custom_call.1} parent=87 // pred_fallthru
        _
    $region88: #{tpu_custom_call.1} parent=5 // pred_fallthru
      _
    %p537 = scmp.le.s32.totalorder 1, %s25
    %p538 = scmp.lt.s32.totalorder %s25, 3
    %p539 = pnand %p537, %p538
    %p540 = pneg %p539
    // Predicated region
    $region93: #{tpu_custom_call.1} parent=5 // pred_check
      _
    $region94: #{tpu_custom_call.1} parent=5 // pred_check_branch
      %542 = sbr.rel (%p539) target = $region96
    $region95: #{tpu_custom_call.1} parent=5 // pred_region
      %s543 = ssub.s32 %s25, 1
      %s544 = smul.u32 16, %s30
      %p545 = scmp.lt.s32.totalorder %s544, 31
      %s546 = scalar_select %p545, %s544, 31
      %s547 = smul.addr %s546, 4
      %s548 = scalar_lea.vmem %s0, %s547
      %p549 = pneg %p51
      %p550 = pneg %p48
      %p551 = pneg %p72
      %p552 = pneg %p69
      %p553 = pneg %p93
      %p554 = pneg %p90
      %p555 = pneg %p114
      %p556 = pneg %p111
      %p557 = pneg %p135
      %p558 = pneg %p132
      %p559 = pneg %p156
      %p560 = pneg %p153
      %p561 = pneg %p177
      %p562 = pneg %p174
      %p563 = pneg %p198
      %p564 = pneg %p195
      %p565 = pneg %p219
      %p566 = pneg %p216
      %p567 = pneg %p240
      %p568 = pneg %p237
      %p569 = pneg %p261
      %p570 = pneg %p258
      %p571 = pneg %p282
      %p572 = pneg %p279
      %p573 = pneg %p303
      %p574 = pneg %p300
      %p575 = pneg %p324
      %p576 = pneg %p321
      %p577 = pneg %p345
      %p578 = pneg %p342
      %p579 = pneg %p366
      %p580 = pneg %p363
      %p581 = pneg %p387
      %p582 = pneg %p384
      %p583 = pneg %p408
      %p584 = pneg %p405
      %p585 = pneg %p429
      %p586 = pneg %p426
      %p587 = pneg %p455
      %p588 = pneg %p452
      %s589 = smul.u32 8, %s30
      %p590 = scmp.lt.s32.totalorder %s589, 15
      %s591 = scalar_select %p590, %s589, 15
      %s592 = smul.addr %s591, 8
      %s593 = scalar_lea.vmem %s19, %s592
      %s594 = smul.u32 16, %s30
      %p595 = scmp.lt.s32.totalorder %s594, 31
      %s596 = scalar_select %p595, %s594, 31
      %s597 = smul.addr %s596, 4
      %s598 = scalar_lea.vmem %s0, %s597
      %s599 = smul.u32 16, %s30
      %s600 = smul.u32 8, %s30
      %p601 = scmp.lt.s32.totalorder %s600, 15
      %s602 = scalar_select %p601, %s600, 15
      %s603 = smul.addr %s602, 8
      %s604 = scalar_lea.vmem %s19, %s603
      %s605 = smul.u32 8, %s30
      %v607 = vld [vmem:[%s598] sm:$0xf]
      %v608 = vld [vmem:[%s598 + $0x4] sm:$0xf]
      %v609 = vld [vmem:[%s598 + $0x8] sm:$0xf]
      %v610 = vld [vmem:[%s598 + $0xc] sm:$0xf]
      %v611 = vld [vmem:[%s598 + $0x10] sm:$0xf]
      %v612 = vld [vmem:[%s598 + $0x14] sm:$0xf]
      %v613 = vld [vmem:[%s598 + $0x18] sm:$0xf]
      %v614 = vld [vmem:[%s598 + $0x1c] sm:$0xf]
      %v615 = vld [vmem:[%s598 + $0x20] sm:$0xf]
      %v616 = vld [vmem:[%s598 + $0x24] sm:$0xf]
      %v617 = vld [vmem:[%s598 + $0x28] sm:$0xf]
      %v618 = vld [vmem:[%s598 + $0x2c] sm:$0xf]
      %v619 = vld [vmem:[%s598 + $0x30] sm:$0xf]
      %v620 = vld [vmem:[%s598 + $0x34] sm:$0xf]
      %v621 = vld [vmem:[%s598 + $0x38] sm:$0xf]
      %v622 = vld [vmem:[%s598 + $0x3c] sm:$0xf]
      %v623 = vld [vmem:[%s1] sm:$0xf]
      %v624 = vld [vmem:[%s2] sm:$0x1]
      %v626 = vlaneseq
      %v627 = vshrl.u32 %v626, 7
      %v628 = vsub.s32 0, %v627
      %v629 = vrot.slane %v624, %v628
      %v647 = vunpack.c.l.b16 %v607
      %v648 = vunpack.c.l.b16 %v608
      %v649 = vunpack.c.l.b16 %v609
      %v650 = vunpack.c.l.b16 %v610
      %v651 = vunpack.c.l.b16 %v611
      %v652 = vunpack.c.l.b16 %v612
      %v653 = vunpack.c.l.b16 %v613
      %v654 = vunpack.c.l.b16 %v614
      %v655 = vunpack.c.l.b16 %v615
      %v656 = vunpack.c.l.b16 %v616
      %v657 = vunpack.c.l.b16 %v617
      %v658 = vunpack.c.l.b16 %v618
      %v659 = vunpack.c.l.b16 %v619
      %v660 = vunpack.c.l.b16 %v620
      %v661 = vunpack.c.l.b16 %v621
      %v662 = vunpack.c.l.b16 %v622
      %v663 = vpack.c.b16 %v648, %v647
      %v664 = vpack.c.b16 %v650, %v649
      %v665 = vpack.c.b16 %v652, %v651
      %v666 = vpack.c.b16 %v654, %v653
      %v667 = vpack.c.b16 %v656, %v655
      %v668 = vpack.c.b16 %v658, %v657
      %v669 = vpack.c.b16 %v660, %v659
      %v670 = vpack.c.b16 %v662, %v661
      %vm671 = vcmask 64512
      %v673 = vsel %vm671, %v663, 0
      %v676 = vsel %vm671, %v664, 0
      %v679 = vsel %vm671, %v665, 0
      %v682 = vsel %vm671, %v666, 0
      %v685 = vsel %vm671, %v667, 0
      %v688 = vsel %vm671, %v668, 0
      %v691 = vsel %vm671, %v669, 0
      %v694 = vsel %vm671, %v670, 0
      %vm696 = vcmask 1043456
      %v698 = vsel %vm696, %v623, 0
      %700 = vmatprep.subr.bf16.mxu0 0
      %701 = vmatpush1.bf16.msra.mxu0 %v698
      %702 = vmatprep.subr.bf16.mxu0 0
      %703 = vmatpush1.bf16.msra.mxu0 0
      %704 = vmatprep.subr.bf16.mxu0 0
      %705 = vmatpush1.bf16.msra.mxu0 0
      %706 = vmatprep.subr.bf16.mxu0 0
      %707 = vmatpush1.bf16.msra.mxu0 0
      %708 = vmatprep.subr.bf16.mxu0 0
      %709 = vmatpush1.bf16.msra.mxu0 0
      %710 = vmatprep.subr.bf16.mxu0 0
      %711 = vmatpush1.bf16.msra.mxu0 0
      %712 = vmatprep.subr.bf16.mxu0 0
      %713 = vmatpush1.bf16.msra.mxu0 0
      %714 = vmatprep.subr.bf16.mxu0 0
      %715 = vmatpush1.bf16.msra.mxu0 0
      %716 = vmatprep.subr.bf16.mxu0 0
      %717 = vmatpush1.bf16.msra.mxu0 0
      %718 = vmatprep.subr.bf16.mxu0 0
      %719 = vmatpush1.bf16.msra.mxu0 0
      %720 = vmatprep.subr.bf16.mxu0 0
      %721 = vmatpush1.bf16.msra.mxu0 0
      %722 = vmatprep.subr.bf16.mxu0 0
      %723 = vmatpush1.bf16.msra.mxu0 0
      %724 = vmatprep.subr.bf16.mxu0 0
      %725 = vmatpush1.bf16.msra.mxu0 0
      %726 = vmatprep.subr.bf16.mxu0 0
      %727 = vmatpush1.bf16.msra.mxu0 0
      %728 = vmatprep.subr.bf16.mxu0 0
      %729 = vmatpush1.bf16.msra.mxu0 0
      %730 = vmatprep.subr.bf16.mxu0 0
      %731 = vmatpush1.bf16.msra.mxu0 0
      %732 = vmatprep.mubr.bf16.mxu0 0
      %733 = vmatmul.mubr.bf16.gmra.mrb[0].mxu0 %v673
      %v734 = vpop.f32.mrb[0].mxu0
      %v735 = vadd.f32 %v629, %v734
      %v736 = vpop.f32.mrb[0].mxu0
      %v737 = vpop.f32.mrb[0].mxu0
      %v738 = vadd.f32 %v629, %v737
      %v739 = vpop.f32.mrb[0].mxu0
      %740 = vmatprep.mubr.bf16.mxu0 0
      %741 = vmatmul.mubr.bf16.gmra.mrb[0].mxu0 %v676
      %v742 = vpop.f32.mrb[0].mxu0
      %v743 = vadd.f32 %v629, %v742
      %v744 = vpop.f32.mrb[0].mxu0
      %v745 = vpop.f32.mrb[0].mxu0
      %v746 = vadd.f32 %v629, %v745
      %v747 = vpop.f32.mrb[0].mxu0
      %748 = vmatprep.mubr.bf16.mxu0 0
      %749 = vmatmul.mubr.bf16.gmra.mrb[0].mxu0 %v679
      %v750 = vpop.f32.mrb[0].mxu0
      %v751 = vadd.f32 %v629, %v750
      %v752 = vpop.f32.mrb[0].mxu0
      %v753 = vpop.f32.mrb[0].mxu0
      %v754 = vadd.f32 %v629, %v753
      %v755 = vpop.f32.mrb[0].mxu0
      %756 = vmatprep.mubr.bf16.mxu0 0
      %757 = vmatmul.mubr.bf16.gmra.mrb[0].mxu0 %v682
      %v758 = vpop.f32.mrb[0].mxu0
      %v759 = vadd.f32 %v629, %v758
      %v760 = vpop.f32.mrb[0].mxu0
      %v761 = vpop.f32.mrb[0].mxu0
      %v762 = vadd.f32 %v629, %v761
      %v763 = vpop.f32.mrb[0].mxu0
      %764 = vmatprep.mubr.bf16.mxu0 0
      %765 = vmatmul.mubr.bf16.gmra.mrb[0].mxu0 %v685
      %v766 = vpop.f32.mrb[0].mxu0
      %v767 = vadd.f32 %v629, %v766
      %v768 = vpop.f32.mrb[0].mxu0
      %v769 = vpop.f32.mrb[0].mxu0
      %v770 = vadd.f32 %v629, %v769
      %v771 = vpop.f32.mrb[0].mxu0
      %772 = vmatprep.mubr.bf16.mxu0 0
      %773 = vmatmul.mubr.bf16.gmra.mrb[0].mxu0 %v688
      %v774 = vpop.f32.mrb[0].mxu0
      %v775 = vadd.f32 %v629, %v774
      %v776 = vpop.f32.mrb[0].mxu0
      %v777 = vpop.f32.mrb[0].mxu0
      %v778 = vadd.f32 %v629, %v777
      %v779 = vpop.f32.mrb[0].mxu0
      %780 = vmatprep.mubr.bf16.mxu0 0
      %781 = vmatmul.mubr.bf16.gmra.mrb[0].mxu0 %v691
      %v782 = vpop.f32.mrb[0].mxu0
      %v783 = vadd.f32 %v629, %v782
      %v784 = vpop.f32.mrb[0].mxu0
      %v785 = vpop.f32.mrb[0].mxu0
      %v786 = vadd.f32 %v629, %v785
      %v787 = vpop.f32.mrb[0].mxu0
      %788 = vmatprep.mubr.bf16.mxu0 0
      %789 = vmatmul.mubr.bf16.gmra.mrb[0].mxu0 %v694
      %v790 = vpop.f32.mrb[0].mxu0
      %v791 = vadd.f32 %v629, %v790
      %v792 = vpop.f32.mrb[0].mxu0
      %v793 = vpop.f32.mrb[0].mxu0
      %v794 = vadd.f32 %v629, %v793
      %v795 = vpop.f32.mrb[0].mxu0
      %796 = vdwg.mxu0
      %v797 = vmax.f32 %v735, 0.0
      %v798 = vmax.f32 %v738, 0.0
      %v799 = vmax.f32 %v743, 0.0
      %v800 = vmax.f32 %v746, 0.0
      %v801 = vmax.f32 %v751, 0.0
      %v802 = vmax.f32 %v754, 0.0
      %v803 = vmax.f32 %v759, 0.0
      %v804 = vmax.f32 %v762, 0.0
      %v805 = vmax.f32 %v767, 0.0
      %v806 = vmax.f32 %v770, 0.0
      %v807 = vmax.f32 %v775, 0.0
      %v808 = vmax.f32 %v778, 0.0
      %v809 = vmax.f32 %v783, 0.0
      %v810 = vmax.f32 %v786, 0.0
      %v811 = vmax.f32 %v791, 0.0
      %v812 = vmax.f32 %v794, 0.0
      %v813 = vpack.c.bf16 %v798, %v797
      %v814 = vpack.c.bf16 %v800, %v799
      %v815 = vpack.c.bf16 %v802, %v801
      %v816 = vpack.c.bf16 %v804, %v803
      %v817 = vpack.c.bf16 %v806, %v805
      %v818 = vpack.c.bf16 %v808, %v807
      %v819 = vpack.c.bf16 %v810, %v809
      %v820 = vpack.c.bf16 %v812, %v811
      %vm821 = vsmask.f32 7424
      %v823 = vshrl.u32 %v813, 16
      %v825 = vshll.u32 %v813, 16
      %v827 = vrot.slane %v825, 1
      %v828 = vor.u32 %v823, %v827
      %v830 = vshll.u32 %v814, 16
      %v832 = vrot.slane %v830, 1
      %v833 = vsel %vm821, %v828, %v832
      %v834 = vshrl.u32 %v814, 16
      %v836 = vor.u32 %v834, %v832
      %v838 = vshll.u32 %v815, 16
      %v840 = vrot.slane %v838, 1
      %v841 = vsel %vm821, %v836, %v840
      %v842 = vshrl.u32 %v815, 16
      %v844 = vor.u32 %v842, %v840
      %v846 = vshll.u32 %v816, 16
      %v848 = vrot.slane %v846, 1
      %v849 = vsel %vm821, %v844, %v848
      %v850 = vshrl.u32 %v816, 16
      %v852 = vor.u32 %v850, %v848
      %v854 = vshll.u32 %v817, 16
      %v856 = vrot.slane %v854, 1
      %v857 = vsel %vm821, %v852, %v856
      %v858 = vshrl.u32 %v817, 16
      %v860 = vor.u32 %v858, %v856
      %v862 = vshll.u32 %v818, 16
      %v864 = vrot.slane %v862, 1
      %v865 = vsel %vm821, %v860, %v864
      %v866 = vshrl.u32 %v818, 16
      %v868 = vor.u32 %v866, %v864
      %v870 = vshll.u32 %v819, 16
      %v872 = vrot.slane %v870, 1
      %v873 = vsel %vm821, %v868, %v872
      %v874 = vshrl.u32 %v819, 16
      %v876 = vor.u32 %v874, %v872
      %v878 = vshll.u32 %v820, 16
      %v880 = vrot.slane %v878, 1
      %v881 = vsel %vm821, %v876, %v880
      %v882 = vshrl.u32 %v820, 16
      %v884 = vor.u32 %v882, %v880
      %885 = vrot.lane.b32.xlu0 %v833, 16
      %v886 = vpop.permute.xlu0 %885
      %887 = vrot.lane.b32.xlu0 %v841, 16
      %v888 = vpop.permute.xlu0 %887
      %889 = vrot.lane.b32.xlu0 %v849, 16
      %v890 = vpop.permute.xlu0 %889
      %891 = vrot.lane.b32.xlu0 %v857, 16
      %v892 = vpop.permute.xlu0 %891
      %893 = vrot.lane.b32.xlu0 %v865, 16
      %v894 = vpop.permute.xlu0 %893
      %895 = vrot.lane.b32.xlu0 %v873, 16
      %v896 = vpop.permute.xlu0 %895
      %897 = vrot.lane.b32.xlu0 %v881, 16
      %v898 = vpop.permute.xlu0 %897
      %899 = vrot.lane.b32.xlu0 %v884, 16
      %v900 = vpop.permute.xlu0 %899
      %vm909 = vcmask 1046528
      %v910 = vrot.slane %v813, 1
      %v911 = vrot.slane %v814, 1
      %v912 = vsel %vm909, %v910, %v911
      %v913 = vrot.slane %v815, 1
      %v914 = vsel %vm909, %v911, %v913
      %v915 = vrot.slane %v816, 1
      %v916 = vsel %vm909, %v913, %v915
      %v917 = vrot.slane %v817, 1
      %v918 = vsel %vm909, %v915, %v917
      %v919 = vrot.slane %v818, 1
      %v920 = vsel %vm909, %v917, %v919
      %v921 = vrot.slane %v819, 1
      %v922 = vsel %vm909, %v919, %v921
      %v923 = vrot.slane %v820, 1
      %v924 = vsel %vm909, %v921, %v923
      %925 = vrot.lane.b32.xlu0 %v912, 32
      %v926 = vpop.permute.xlu0 %925
      %927 = vrot.lane.b32.xlu0 %v914, 32
      %v928 = vpop.permute.xlu0 %927
      %929 = vrot.lane.b32.xlu0 %v916, 32
      %v930 = vpop.permute.xlu0 %929
      %931 = vrot.lane.b32.xlu0 %v918, 32
      %v932 = vpop.permute.xlu0 %931
      %933 = vrot.lane.b32.xlu0 %v920, 32
      %v934 = vpop.permute.xlu0 %933
      %935 = vrot.lane.b32.xlu0 %v922, 32
      %v936 = vpop.permute.xlu0 %935
      %937 = vrot.lane.b32.xlu0 %v924, 32
      %v938 = vpop.permute.xlu0 %937
      %939 = vrot.lane.b32.xlu0 %v923, 32
      %v940 = vpop.permute.xlu0 %939
      %vm941 = vcmask 130048
      %v943 = vsel %vm941, %v813, %v886
      %v945 = vsel %vm941, %v814, %v888
      %v947 = vsel %vm941, %v815, %v890
      %v949 = vsel %vm941, %v816, %v892
      %v951 = vsel %vm941, %v817, %v894
      %v953 = vsel %vm941, %v818, %v896
      %v955 = vsel %vm941, %v819, %v898
      %v957 = vsel %vm941, %v820, %v900
      %vm958 = vcmask 261120
      %v960 = vsel %vm958, %v943, %v926
      %v962 = vsel %vm958, %v945, %v928
      %v964 = vsel %vm958, %v947, %v930
      %v966 = vsel %vm958, %v949, %v932
      %v968 = vsel %vm958, %v951, %v934
      %v970 = vsel %vm958, %v953, %v936
      %v972 = vsel %vm958, %v955, %v938
      %v974 = vsel %vm958, %v957, %v940
      %v975 = vld [vmem:[%s3] sm:$0xf]
      %v976 = vld [vmem:[%s3 + $0x4] sm:$0xf]
      %v977 = vld [vmem:[%s3 + $0x8] sm:$0xf]
      %v978 = vld [vmem:[%s3 + $0xc] sm:$0xf]
      %v979 = vld [vmem:[%s3 + $0x10] sm:$0xf]
      %v980 = vld [vmem:[%s3 + $0x14] sm:$0xf]
      %v981 = vld [vmem:[%s4] sm:$0x1]
      %v983 = vlaneseq
      %v984 = vshrl.u32 %v983, 7
      %v985 = vsub.s32 0, %v984
      %v986 = vrot.slane %v981, %v985
      %v994 = vunpack.c.l.b16 %v975
      %v995 = vunpack.c.l.b16 %v976
      %v996 = vunpack.c.l.b16 %v977
      %v997 = vunpack.c.l.b16 %v978
      %v998 = vunpack.c.l.b16 %v979
      %v999 = vunpack.c.l.b16 %v980
      %v1000 = vpack.c.b16 %v995, %v994
      %v1001 = vpack.c.b16 %v997, %v996
      %v1002 = vpack.c.b16 %v999, %v998
      %vm1006 = vcmask 392192
      %v1007 = vsel %vm1006, %v960, 0
      %v1009 = vsel %vm1006, %v962, 0
      %v1011 = vsel %vm1006, %v964, 0
      %v1013 = vsel %vm1006, %v966, 0
      %v1015 = vsel %vm1006, %v968, 0
      %v1017 = vsel %vm1006, %v970, 0
      %v1019 = vsel %vm1006, %v972, 0
      %v1021 = vsel %vm1006, %v974, 0
      %1023 = vmatprep.subr.bf16.mxu0 0
      %1024 = vmatpush1.bf16.msra.mxu0 %v1000
      %1025 = vmatprep.subr.bf16.mxu0 0
      %1026 = vmatpush1.bf16.msra.mxu0 %v1001
      %1027 = vmatprep.subr.bf16.mxu0 0
      %1028 = vmatpush1.bf16.msra.mxu0 %v1002
      %1029 = vmatprep.subr.bf16.mxu0 0
      %1030 = vmatpush1.bf16.msra.mxu0 0
      %1031 = vmatprep.subr.bf16.mxu0 0
      %1032 = vmatpush1.bf16.msra.mxu0 0
      %1033 = vmatprep.subr.bf16.mxu0 0
      %1034 = vmatpush1.bf16.msra.mxu0 0
      %1035 = vmatprep.subr.bf16.mxu0 0
      %1036 = vmatpush1.bf16.msra.mxu0 0
      %1037 = vmatprep.subr.bf16.mxu0 0
      %1038 = vmatpush1.bf16.msra.mxu0 0
      %1039 = vmatprep.subr.bf16.mxu0 0
      %1040 = vmatpush1.bf16.msra.mxu0 0
      %1041 = vmatprep.subr.bf16.mxu0 0
      %1042 = vmatpush1.bf16.msra.mxu0 0
      %1043 = vmatprep.subr.bf16.mxu0 0
      %1044 = vmatpush1.bf16.msra.mxu0 0
      %1045 = vmatprep.subr.bf16.mxu0 0
      %1046 = vmatpush1.bf16.msra.mxu0 0
      %1047 = vmatprep.subr.bf16.mxu0 0
      %1048 = vmatpush1.bf16.msra.mxu0 0
      %1049 = vmatprep.subr.bf16.mxu0 0
      %1050 = vmatpush1.bf16.msra.mxu0 0
      %1051 = vmatprep.subr.bf16.mxu0 0
      %1052 = vmatpush1.bf16.msra.mxu0 0
      %1053 = vmatprep.subr.bf16.mxu0 0
      %1054 = vmatpush1.bf16.msra.mxu0 0
      %1055 = vmatprep.mubr.bf16.mxu0 0
      %1056 = vmatmul.mubr.bf16.gmra.mrb[0].mxu0 %v1007
      %v1057 = vpop.f32.mrb[0].mxu0
      %v1058 = vadd.f32 %v986, %v1057
      %v1059 = vpop.f32.mrb[0].mxu0
      %v1060 = vpop.f32.mrb[0].mxu0
      %v1061 = vadd.f32 %v986, %v1060
      %v1062 = vpop.f32.mrb[0].mxu0
      %1063 = vmatprep.mubr.bf16.mxu0 0
      %1064 = vmatmul.mubr.bf16.gmra.mrb[0].mxu0 %v1009
      %v1065 = vpop.f32.mrb[0].mxu0
      %v1066 = vadd.f32 %v986, %v1065
      %v1067 = vpop.f32.mrb[0].mxu0
      %v1068 = vpop.f32.mrb[0].mxu0
      %v1069 = vadd.f32 %v986, %v1068
      %v1070 = vpop.f32.mrb[0].mxu0
      %1071 = vmatprep.mubr.bf16.mxu0 0
      %1072 = vmatmul.mubr.bf16.gmra.mrb[0].mxu0 %v1011
      %v1073 = vpop.f32.mrb[0].mxu0
      %v1074 = vadd.f32 %v986, %v1073
      %v1075 = vpop.f32.mrb[0].mxu0
      %v1076 = vpop.f32.mrb[0].mxu0
      %v1077 = vadd.f32 %v986, %v1076
      %v1078 = vpop.f32.mrb[0].mxu0
      %1079 = vmatprep.mubr.bf16.mxu0 0
      %1080 = vmatmul.mubr.bf16.gmra.mrb[0].mxu0 %v1013
      %v1081 = vpop.f32.mrb[0].mxu0
      %v1082 = vadd.f32 %v986, %v1081
      %v1083 = vpop.f32.mrb[0].mxu0
      %v1084 = vpop.f32.mrb[0].mxu0
      %v1085 = vadd.f32 %v986, %v1084
      %v1086 = vpop.f32.mrb[0].mxu0
      %1087 = vmatprep.mubr.bf16.mxu0 0
      %1088 = vmatmul.mubr.bf16.gmra.mrb[0].mxu0 %v1015
      %v1089 = vpop.f32.mrb[0].mxu0
      %v1090 = vadd.f32 %v986, %v1089
      %v1091 = vpop.f32.mrb[0].mxu0
      %v1092 = vpop.f32.mrb[0].mxu0
      %v1093 = vadd.f32 %v986, %v1092
      %v1094 = vpop.f32.mrb[0].mxu0
      %1095 = vmatprep.mubr.bf16.mxu0 0
      %1096 = vmatmul.mubr.bf16.gmra.mrb[0].mxu0 %v1017
      %v1097 = vpop.f32.mrb[0].mxu0
      %v1098 = vadd.f32 %v986, %v1097
      %v1099 = vpop.f32.mrb[0].mxu0
      %v1100 = vpop.f32.mrb[0].mxu0
      %v1101 = vadd.f32 %v986, %v1100
      %v1102 = vpop.f32.mrb[0].mxu0
      %1103 = vmatprep.mubr.bf16.mxu0 0
      %1104 = vmatmul.mubr.bf16.gmra.mrb[0].mxu0 %v1019
      %v1105 = vpop.f32.mrb[0].mxu0
      %v1106 = vadd.f32 %v986, %v1105
      %v1107 = vpop.f32.mrb[0].mxu0
      %v1108 = vpop.f32.mrb[0].mxu0
      %v1109 = vadd.f32 %v986, %v1108
      %v1110 = vpop.f32.mrb[0].mxu0
      %1111 = vmatprep.mubr.bf16.mxu0 0
      %1112 = vmatmul.mubr.bf16.gmra.mrb[0].mxu0 %v1021
      %v1113 = vpop.f32.mrb[0].mxu0
      %v1114 = vadd.f32 %v986, %v1113
      %v1115 = vpop.f32.mrb[0].mxu0
      %v1116 = vpop.f32.mrb[0].mxu0
      %v1117 = vadd.f32 %v986, %v1116
      %v1118 = vpop.f32.mrb[0].mxu0
      %1119 = vdwg.mxu0
      %v1120 = vmax.f32 %v1058, 0.0
      %v1121 = vmax.f32 %v1061, 0.0
      %v1122 = vmax.f32 %v1066, 0.0
      %v1123 = vmax.f32 %v1069, 0.0
      %v1124 = vmax.f32 %v1074, 0.0
      %v1125 = vmax.f32 %v1077, 0.0
      %v1126 = vmax.f32 %v1082, 0.0
      %v1127 = vmax.f32 %v1085, 0.0
      %v1128 = vmax.f32 %v1090, 0.0
      %v1129 = vmax.f32 %v1093, 0.0
      %v1130 = vmax.f32 %v1098, 0.0
      %v1131 = vmax.f32 %v1101, 0.0
      %v1132 = vmax.f32 %v1106, 0.0
      %v1133 = vmax.f32 %v1109, 0.0
      %v1134 = vmax.f32 %v1114, 0.0
      %v1135 = vmax.f32 %v1117, 0.0
      %v1136 = vld [vmem:[%s5] sm:$0x1]
      %v1138 = vlaneseq
      %v1139 = vshrl.u32 %v1138, 7
      %v1140 = vsub.s32 0, %v1139
      %v1141 = vrot.slane %v1136, %v1140
      %v1143 = vmul.f32 %v1120, %v1141
      %v1144 = vmul.f32 %v1121, %v1141
      %v1145 = vmul.f32 %v1122, %v1141
      %v1146 = vmul.f32 %v1123, %v1141
      %v1147 = vmul.f32 %v1124, %v1141
      %v1148 = vmul.f32 %v1125, %v1141
      %v1149 = vmul.f32 %v1126, %v1141
      %v1150 = vmul.f32 %v1127, %v1141
      %v1151 = vmul.f32 %v1128, %v1141
      %v1152 = vmul.f32 %v1129, %v1141
      %v1153 = vmul.f32 %v1130, %v1141
      %v1154 = vmul.f32 %v1131, %v1141
      %v1155 = vmul.f32 %v1132, %v1141
      %v1156 = vmul.f32 %v1133, %v1141
      %v1157 = vmul.f32 %v1134, %v1141
      %v1158 = vmul.f32 %v1135, %v1141
      %v1159 = vld [vmem:[%s6] sm:$0x1]
      %v1161 = vlaneseq
      %v1162 = vshrl.u32 %v1161, 7
      %v1163 = vsub.s32 0, %v1162
      %v1164 = vrot.slane %v1159, %v1163
      %v1166 = vadd.f32 %v1143, %v1164
      %v1167 = vadd.f32 %v1144, %v1164
      %v1168 = vadd.f32 %v1145, %v1164
      %v1169 = vadd.f32 %v1146, %v1164
      %v1170 = vadd.f32 %v1147, %v1164
      %v1171 = vadd.f32 %v1148, %v1164
      %v1172 = vadd.f32 %v1149, %v1164
      %v1173 = vadd.f32 %v1150, %v1164
      %v1174 = vadd.f32 %v1151, %v1164
      %v1175 = vadd.f32 %v1152, %v1164
      %v1176 = vadd.f32 %v1153, %v1164
      %v1177 = vadd.f32 %v1154, %v1164
      %v1178 = vadd.f32 %v1155, %v1164
      %v1179 = vadd.f32 %v1156, %v1164
      %v1180 = vadd.f32 %v1157, %v1164
      %v1181 = vadd.f32 %v1158, %v1164
      %v1182 = vpack.c.bf16 %v1167, %v1166
      %v1183 = vpack.c.bf16 %v1169, %v1168
      %v1184 = vpack.c.bf16 %v1171, %v1170
      %v1185 = vpack.c.bf16 %v1173, %v1172
      %v1186 = vpack.c.bf16 %v1175, %v1174
      %v1187 = vpack.c.bf16 %v1177, %v1176
      %v1188 = vpack.c.bf16 %v1179, %v1178
      %v1189 = vpack.c.bf16 %v1181, %v1180
      %v1190 = vld [vmem:[%s7] sm:$0xf]
      %v1191 = vld [vmem:[%s7 + $0x4] sm:$0xf]
      %v1192 = vld [vmem:[%s8] sm:$0x1]
      %v1194 = vlaneseq
      %v1195 = vshrl.u32 %v1194, 7
      %v1196 = vsub.s32 0, %v1195
      %v1197 = vrot.slane %v1192, %v1196
      %v1201 = vunpack.c.l.b16 %v1190
      %v1202 = vunpack.c.l.b16 %v1191
      %v1203 = vpack.c.b16 %v1202, %v1201
      %v1206 = vsel %vm941, %v1182, 0
      %v1209 = vsel %vm941, %v1183, 0
      %v1212 = vsel %vm941, %v1184, 0
      %v1215 = vsel %vm941, %v1185, 0
      %v1218 = vsel %vm941, %v1186, 0
      %v1221 = vsel %vm941, %v1187, 0
      %v1224 = vsel %vm941, %v1188, 0
      %v1227 = vsel %vm941, %v1189, 0
      %1229 = vmatprep.subr.bf16.mxu0 0
      %1230 = vmatpush1.bf16.msra.mxu0 %v1203
      %1231 = vmatprep.subr.bf16.mxu0 0
      %1232 = vmatpush1.bf16.msra.mxu0 0
      %1233 = vmatprep.subr.bf16.mxu0 0
      %1234 = vmatpush1.bf16.msra.mxu0 0
      %1235 = vmatprep.subr.bf16.mxu0 0
      %1236 = vmatpush1.bf16.msra.mxu0 0
      %1237 = vmatprep.subr.bf16.mxu0 0
      %1238 = vmatpush1.bf16.msra.mxu0 0
      %1239 = vmatprep.subr.bf16.mxu0 0
      %1240 = vmatpush1.bf16.msra.mxu0 0
      %1241 = vmatprep.subr.bf16.mxu0 0
      %1242 = vmatpush1.bf16.msra.mxu0 0
      %1243 = vmatprep.subr.bf16.mxu0 0
      %1244 = vmatpush1.bf16.msra.mxu0 0
      %1245 = vmatprep.subr.bf16.mxu0 0
      %1246 = vmatpush1.bf16.msra.mxu0 0
      %1247 = vmatprep.subr.bf16.mxu0 0
      %1248 = vmatpush1.bf16.msra.mxu0 0
      %1249 = vmatprep.subr.bf16.mxu0 0
      %1250 = vmatpush1.bf16.msra.mxu0 0
      %1251 = vmatprep.subr.bf16.mxu0 0
      %1252 = vmatpush1.bf16.msra.mxu0 0
      %1253 = vmatprep.subr.bf16.mxu0 0
      %1254 = vmatpush1.bf16.msra.mxu0 0
      %1255 = vmatprep.subr.bf16.mxu0 0
      %1256 = vmatpush1.bf16.msra.mxu0 0
      %1257 = vmatprep.subr.bf16.mxu0 0
      %1258 = vmatpush1.bf16.msra.mxu0 0
      %1259 = vmatprep.subr.bf16.mxu0 0
      %1260 = vmatpush1.bf16.msra.mxu0 0
      %1261 = vmatprep.mubr.bf16.mxu0 0
      %1262 = vmatmul.mubr.bf16.gmra.mrb[0].mxu0 %v1206
      %v1263 = vpop.f32.mrb[0].mxu0
      %v1264 = vadd.f32 %v1197, %v1263
      %v1265 = vpop.f32.mrb[0].mxu0
      %v1266 = vpop.f32.mrb[0].mxu0
      %v1267 = vadd.f32 %v1197, %v1266
      %v1268 = vpop.f32.mrb[0].mxu0
      %1269 = vmatprep.mubr.bf16.mxu0 0
      %1270 = vmatmul.mubr.bf16.gmra.mrb[0].mxu0 %v1209
      %v1271 = vpop.f32.mrb[0].mxu0
      %v1272 = vadd.f32 %v1197, %v1271
      %v1273 = vpop.f32.mrb[0].mxu0
      %v1274 = vpop.f32.mrb[0].mxu0
      %v1275 = vadd.f32 %v1197, %v1274
      %v1276 = vpop.f32.mrb[0].mxu0
      %1277 = vmatprep.mubr.bf16.mxu0 0
      %1278 = vmatmul.mubr.bf16.gmra.mrb[0].mxu0 %v1212
      %v1279 = vpop.f32.mrb[0].mxu0
      %v1280 = vadd.f32 %v1197, %v1279
      %v1281 = vpop.f32.mrb[0].mxu0
      %v1282 = vpop.f32.mrb[0].mxu0
      %v1283 = vadd.f32 %v1197, %v1282
      %v1284 = vpop.f32.mrb[0].mxu0
      %1285 = vmatprep.mubr.bf16.mxu0 0
      %1286 = vmatmul.mubr.bf16.gmra.mrb[0].mxu0 %v1215
      %v1287 = vpop.f32.mrb[0].mxu0
      %v1288 = vadd.f32 %v1197, %v1287
      %v1289 = vpop.f32.mrb[0].mxu0
      %v1290 = vpop.f32.mrb[0].mxu0
      %v1291 = vadd.f32 %v1197, %v1290
      %v1292 = vpop.f32.mrb[0].mxu0
      %1293 = vmatprep.mubr.bf16.mxu0 0
      %1294 = vmatmul.mubr.bf16.gmra.mrb[0].mxu0 %v1218
      %v1295 = vpop.f32.mrb[0].mxu0
      %v1296 = vadd.f32 %v1197, %v1295
      %v1297 = vpop.f32.mrb[0].mxu0
      %v1298 = vpop.f32.mrb[0].mxu0
      %v1299 = vadd.f32 %v1197, %v1298
      %v1300 = vpop.f32.mrb[0].mxu0
      %1301 = vmatprep.mubr.bf16.mxu0 0
      %1302 = vmatmul.mubr.bf16.gmra.mrb[0].mxu0 %v1221
      %v1303 = vpop.f32.mrb[0].mxu0
      %v1304 = vadd.f32 %v1197, %v1303
      %v1305 = vpop.f32.mrb[0].mxu0
      %v1306 = vpop.f32.mrb[0].mxu0
      %v1307 = vadd.f32 %v1197, %v1306
      %v1308 = vpop.f32.mrb[0].mxu0
      %1309 = vmatprep.mubr.bf16.mxu0 0
      %1310 = vmatmul.mubr.bf16.gmra.mrb[0].mxu0 %v1224
      %v1311 = vpop.f32.mrb[0].mxu0
      %v1312 = vadd.f32 %v1197, %v1311
      %v1313 = vpop.f32.mrb[0].mxu0
      %v1314 = vpop.f32.mrb[0].mxu0
      %v1315 = vadd.f32 %v1197, %v1314
      %v1316 = vpop.f32.mrb[0].mxu0
      %1317 = vmatprep.mubr.bf16.mxu0 0
      %1318 = vmatmul.mubr.bf16.gmra.mrb[0].mxu0 %v1227
      %v1319 = vpop.f32.mrb[0].mxu0
      %v1320 = vadd.f32 %v1197, %v1319
      %v1321 = vpop.f32.mrb[0].mxu0
      %v1322 = vpop.f32.mrb[0].mxu0
      %v1323 = vadd.f32 %v1197, %v1322
      %v1324 = vpop.f32.mrb[0].mxu0
      %1325 = vdwg.mxu0
      %v1326 = vmax.f32 %v1264, 0.0
      %v1327 = vmax.f32 %v1267, 0.0
      %v1328 = vmax.f32 %v1272, 0.0
      %v1329 = vmax.f32 %v1275, 0.0
      %v1330 = vmax.f32 %v1280, 0.0
      %v1331 = vmax.f32 %v1283, 0.0
      %v1332 = vmax.f32 %v1288, 0.0
      %v1333 = vmax.f32 %v1291, 0.0
      %v1334 = vmax.f32 %v1296, 0.0
      %v1335 = vmax.f32 %v1299, 0.0
      %v1336 = vmax.f32 %v1304, 0.0
      %v1337 = vmax.f32 %v1307, 0.0
      %v1338 = vmax.f32 %v1312, 0.0
      %v1339 = vmax.f32 %v1315, 0.0
      %v1340 = vmax.f32 %v1320, 0.0
      %v1341 = vmax.f32 %v1323, 0.0
      %v1342 = vpack.c.bf16 %v1327, %v1326
      %v1343 = vpack.c.bf16 %v1329, %v1328
      %v1344 = vpack.c.bf16 %v1331, %v1330
      %v1345 = vpack.c.bf16 %v1333, %v1332
      %v1346 = vpack.c.bf16 %v1335, %v1334
      %v1347 = vpack.c.bf16 %v1337, %v1336
      %v1348 = vpack.c.bf16 %v1339, %v1338
      %v1349 = vpack.c.bf16 %v1341, %v1340
      %v1351 = vshrl.u32 %v1342, 16
      %v1353 = vshll.u32 %v1342, 16
      %v1355 = vrot.slane %v1353, 1
      %v1356 = vor.u32 %v1351, %v1355
      %v1358 = vshll.u32 %v1343, 16
      %v1360 = vrot.slane %v1358, 1
      %v1361 = vsel %vm821, %v1356, %v1360
      %v1362 = vshrl.u32 %v1343, 16
      %v1364 = vor.u32 %v1362, %v1360
      %v1366 = vshll.u32 %v1344, 16
      %v1368 = vrot.slane %v1366, 1
      %v1369 = vsel %vm821, %v1364, %v1368
      %v1370 = vshrl.u32 %v1344, 16
      %v1372 = vor.u32 %v1370, %v1368
      %v1374 = vshll.u32 %v1345, 16
      %v1376 = vrot.slane %v1374, 1
      %v1377 = vsel %vm821, %v1372, %v1376
      %v1378 = vshrl.u32 %v1345, 16
      %v1380 = vor.u32 %v1378, %v1376
      %v1382 = vshll.u32 %v1346, 16
      %v1384 = vrot.slane %v1382, 1
      %v1385 = vsel %vm821, %v1380, %v1384
      %v1386 = vshrl.u32 %v1346, 16
      %v1388 = vor.u32 %v1386, %v1384
      %v1390 = vshll.u32 %v1347, 16
      %v1392 = vrot.slane %v1390, 1
      %v1393 = vsel %vm821, %v1388, %v1392
      %v1394 = vshrl.u32 %v1347, 16
      %v1396 = vor.u32 %v1394, %v1392
      %v1398 = vshll.u32 %v1348, 16
      %v1400 = vrot.slane %v1398, 1
      %v1401 = vsel %vm821, %v1396, %v1400
      %v1402 = vshrl.u32 %v1348, 16
      %v1404 = vor.u32 %v1402, %v1400
      %v1406 = vshll.u32 %v1349, 16
      %v1408 = vrot.slane %v1406, 1
      %v1409 = vsel %vm821, %v1404, %v1408
      %v1410 = vshrl.u32 %v1349, 16
      %v1412 = vor.u32 %v1410, %v1408
      %1413 = vrot.lane.b32.xlu0 %v1361, 32
      %v1414 = vpop.permute.xlu0 %1413
      %1415 = vrot.lane.b32.xlu0 %v1369, 32
      %v1416 = vpop.permute.xlu0 %1415
      %1417 = vrot.lane.b32.xlu0 %v1377, 32
      %v1418 = vpop.permute.xlu0 %1417
      %1419 = vrot.lane.b32.xlu0 %v1385, 32
      %v1420 = vpop.permute.xlu0 %1419
      %1421 = vrot.lane.b32.xlu0 %v1393, 32
      %v1422 = vpop.permute.xlu0 %1421
      %1423 = vrot.lane.b32.xlu0 %v1401, 32
      %v1424 = vpop.permute.xlu0 %1423
      %1425 = vrot.lane.b32.xlu0 %v1409, 32
      %v1426 = vpop.permute.xlu0 %1425
      %1427 = vrot.lane.b32.xlu0 %v1412, 32
      %v1428 = vpop.permute.xlu0 %1427
      %v1437 = vrot.slane %v1342, 1
      %v1438 = vrot.slane %v1343, 1
      %v1439 = vsel %vm909, %v1437, %v1438
      %v1440 = vrot.slane %v1344, 1
      %v1441 = vsel %vm909, %v1438, %v1440
      %v1442 = vrot.slane %v1345, 1
      %v1443 = vsel %vm909, %v1440, %v1442
      %v1444 = vrot.slane %v1346, 1
      %v1445 = vsel %vm909, %v1442, %v1444
      %v1446 = vrot.slane %v1347, 1
      %v1447 = vsel %vm909, %v1444, %v1446
      %v1448 = vrot.slane %v1348, 1
      %v1449 = vsel %vm909, %v1446, %v1448
      %v1450 = vrot.slane %v1349, 1
      %v1451 = vsel %vm909, %v1448, %v1450
      %1452 = vrot.lane.b32.xlu0 %v1439, 64
      %v1453 = vpop.permute.xlu0 %1452
      %1454 = vrot.lane.b32.xlu0 %v1441, 64
      %v1455 = vpop.permute.xlu0 %1454
      %1456 = vrot.lane.b32.xlu0 %v1443, 64
      %v1457 = vpop.permute.xlu0 %1456
      %1458 = vrot.lane.b32.xlu0 %v1445, 64
      %v1459 = vpop.permute.xlu0 %1458
      %1460 = vrot.lane.b32.xlu0 %v1447, 64
      %v1461 = vpop.permute.xlu0 %1460
      %1462 = vrot.lane.b32.xlu0 %v1449, 64
      %v1463 = vpop.permute.xlu0 %1462
      %1464 = vrot.lane.b32.xlu0 %v1451, 64
      %v1465 = vpop.permute.xlu0 %1464
      %1466 = vrot.lane.b32.xlu0 %v1450, 64
      %v1467 = vpop.permute.xlu0 %1466
      %v1469 = vsel %vm958, %v1342, %v1414
      %v1471 = vsel %vm958, %v1343, %v1416
      %v1473 = vsel %vm958, %v1344, %v1418
      %v1475 = vsel %vm958, %v1345, %v1420
      %v1477 = vsel %vm958, %v1346, %v1422
      %v1479 = vsel %vm958, %v1347, %v1424
      %v1481 = vsel %vm958, %v1348, %v1426
      %v1483 = vsel %vm958, %v1349, %v1428
      %vm1484 = vcmask 523264
      %v1486 = vsel %vm1484, %v1469, %v1453
      %v1488 = vsel %vm1484, %v1471, %v1455
      %v1490 = vsel %vm1484, %v1473, %v1457
      %v1492 = vsel %vm1484, %v1475, %v1459
      %v1494 = vsel %vm1484, %v1477, %v1461
      %v1496 = vsel %vm1484, %v1479, %v1463
      %v1498 = vsel %vm1484, %v1481, %v1465
      %v1500 = vsel %vm1484, %v1483, %v1467
      %v1501 = vld [vmem:[%s9] sm:$0xf]
      %v1502 = vld [vmem:[%s9 + $0x4] sm:$0xf]
      %v1503 = vld [vmem:[%s9 + $0x8] sm:$0xf]
      %v1504 = vld [vmem:[%s9 + $0xc] sm:$0xf]
      %v1505 = vld [vmem:[%s9 + $0x10] sm:$0xf]
      %v1506 = vld [vmem:[%s9 + $0x14] sm:$0xf]
      %v1507 = vld [vmem:[%s9 + $0x18] sm:$0xf]
      %v1508 = vld [vmem:[%s9 + $0x1c] sm:$0xf]
      %v1509 = vld [vmem:[%s9 + $0x20] sm:$0xf]
      %v1510 = vld [vmem:[%s9 + $0x24] sm:$0xf]
      %v1511 = vld [vmem:[%s9 + $0x28] sm:$0xf]
      %v1512 = vld [vmem:[%s9 + $0x2c] sm:$0xf]
      %v1513 = vld [vmem:[%s10] sm:$0x1]
      %v1515 = vlaneseq
      %v1516 = vshrl.u32 %v1515, 7
      %v1517 = vsub.s32 0, %v1516
      %v1518 = vrot.slane %v1513, %v1517
      %v1532 = vunpack.c.l.b16 %v1501
      %v1533 = vunpack.c.l.b16 %v1502
      %v1534 = vunpack.c.l.b16 %v1503
      %v1535 = vunpack.c.l.b16 %v1504
      %v1536 = vunpack.c.l.b16 %v1505
      %v1537 = vunpack.c.l.b16 %v1506
      %v1538 = vunpack.c.l.b16 %v1507
      %v1539 = vunpack.c.l.b16 %v1508
      %v1540 = vunpack.c.l.b16 %v1509
      %v1541 = vunpack.c.l.b16 %v1510
      %v1542 = vunpack.c.l.b16 %v1511
      %v1543 = vunpack.c.l.b16 %v1512
      %v1544 = vpack.c.b16 %v1533, %v1532
      %v1545 = vpack.c.b16 %v1535, %v1534
      %v1546 = vpack.c.b16 %v1537, %v1536
      %v1547 = vpack.c.b16 %v1539, %v1538
      %v1548 = vpack.c.b16 %v1541, %v1540
      %v1549 = vpack.c.b16 %v1543, %v1542
      %vm1556 = vcmask 785408
      %v1557 = vsel %vm1556, %v1486, 0
      %v1559 = vsel %vm1556, %v1488, 0
      %v1561 = vsel %vm1556, %v1490, 0
      %v1563 = vsel %vm1556, %v1492, 0
      %v1565 = vsel %vm1556, %v1494, 0
      %v1567 = vsel %vm1556, %v1496, 0
      %v1569 = vsel %vm1556, %v1498, 0
      %v1571 = vsel %vm1556, %v1500, 0
      %1573 = vmatprep.subr.bf16.mxu0 0
      %1574 = vmatpush1.bf16.msra.mxu0 %v1544
      %1575 = vmatprep.subr.bf16.mxu0 0
      %1576 = vmatpush1.bf16.msra.mxu0 %v1545
      %1577 = vmatprep.subr.bf16.mxu0 0
      %1578 = vmatpush1.bf16.msra.mxu0 %v1546
      %1579 = vmatprep.subr.bf16.mxu0 0
      %1580 = vmatpush1.bf16.msra.mxu0 %v1547
      %1581 = vmatprep.subr.bf16.mxu0 0
      %1582 = vmatpush1.bf16.msra.mxu0 %v1548
      %1583 = vmatprep.subr.bf16.mxu0 0
      %1584 = vmatpush1.bf16.msra.mxu0 %v1549
      %1585 = vmatprep.subr.bf16.mxu0 0
      %1586 = vmatpush1.bf16.msra.mxu0 0
      %1587 = vmatprep.subr.bf16.mxu0 0
      %1588 = vmatpush1.bf16.msra.mxu0 0
      %1589 = vmatprep.subr.bf16.mxu0 0
      %1590 = vmatpush1.bf16.msra.mxu0 0
      %1591 = vmatprep.subr.bf16.mxu0 0
      %1592 = vmatpush1.bf16.msra.mxu0 0
      %1593 = vmatprep.subr.bf16.mxu0 0
      %1594 = vmatpush1.bf16.msra.mxu0 0
      %1595 = vmatprep.subr.bf16.mxu0 0
      %1596 = vmatpush1.bf16.msra.mxu0 0
      %1597 = vmatprep.subr.bf16.mxu0 0
      %1598 = vmatpush1.bf16.msra.mxu0 0
      %1599 = vmatprep.subr.bf16.mxu0 0
      %1600 = vmatpush1.bf16.msra.mxu0 0
      %1601 = vmatprep.subr.bf16.mxu0 0
      %1602 = vmatpush1.bf16.msra.mxu0 0
      %1603 = vmatprep.subr.bf16.mxu0 0
      %1604 = vmatpush1.bf16.msra.mxu0 0
      %1605 = vmatprep.mubr.bf16.mxu0 0
      %1606 = vmatmul.mubr.bf16.gmra.mrb[0].mxu0 %v1557
      %v1607 = vpop.f32.mrb[0].mxu0
      %v1608 = vadd.f32 %v1518, %v1607
      %v1609 = vpop.f32.mrb[0].mxu0
      %v1610 = vpop.f32.mrb[0].mxu0
      %v1611 = vadd.f32 %v1518, %v1610
      %v1612 = vpop.f32.mrb[0].mxu0
      %1613 = vmatprep.mubr.bf16.mxu0 0
      %1614 = vmatmul.mubr.bf16.gmra.mrb[0].mxu0 %v1559
      %v1615 = vpop.f32.mrb[0].mxu0
      %v1616 = vadd.f32 %v1518, %v1615
      %v1617 = vpop.f32.mrb[0].mxu0
      %v1618 = vpop.f32.mrb[0].mxu0
      %v1619 = vadd.f32 %v1518, %v1618
      %v1620 = vpop.f32.mrb[0].mxu0
      %1621 = vmatprep.mubr.bf16.mxu0 0
      %1622 = vmatmul.mubr.bf16.gmra.mrb[0].mxu0 %v1561
      %v1623 = vpop.f32.mrb[0].mxu0
      %v1624 = vadd.f32 %v1518, %v1623
      %v1625 = vpop.f32.mrb[0].mxu0
      %v1626 = vpop.f32.mrb[0].mxu0
      %v1627 = vadd.f32 %v1518, %v1626
      %v1628 = vpop.f32.mrb[0].mxu0
      %1629 = vmatprep.mubr.bf16.mxu0 0
      %1630 = vmatmul.mubr.bf16.gmra.mrb[0].mxu0 %v1563
      %v1631 = vpop.f32.mrb[0].mxu0
      %v1632 = vadd.f32 %v1518, %v1631
      %v1633 = vpop.f32.mrb[0].mxu0
      %v1634 = vpop.f32.mrb[0].mxu0
      %v1635 = vadd.f32 %v1518, %v1634
      %v1636 = vpop.f32.mrb[0].mxu0
      %1637 = vmatprep.mubr.bf16.mxu0 0
      %1638 = vmatmul.mubr.bf16.gmra.mrb[0].mxu0 %v1565
      %v1639 = vpop.f32.mrb[0].mxu0
      %v1640 = vadd.f32 %v1518, %v1639
      %v1641 = vpop.f32.mrb[0].mxu0
      %v1642 = vpop.f32.mrb[0].mxu0
      %v1643 = vadd.f32 %v1518, %v1642
      %v1644 = vpop.f32.mrb[0].mxu0
      %1645 = vmatprep.mubr.bf16.mxu0 0
      %1646 = vmatmul.mubr.bf16.gmra.mrb[0].mxu0 %v1567
      %v1647 = vpop.f32.mrb[0].mxu0
      %v1648 = vadd.f32 %v1518, %v1647
      %v1649 = vpop.f32.mrb[0].mxu0
      %v1650 = vpop.f32.mrb[0].mxu0
      %v1651 = vadd.f32 %v1518, %v1650
      %v1652 = vpop.f32.mrb[0].mxu0
      %1653 = vmatprep.mubr.bf16.mxu0 0
      %1654 = vmatmul.mubr.bf16.gmra.mrb[0].mxu0 %v1569
      %v1655 = vpop.f32.mrb[0].mxu0
      %v1656 = vadd.f32 %v1518, %v1655
      %v1657 = vpop.f32.mrb[0].mxu0
      %v1658 = vpop.f32.mrb[0].mxu0
      %v1659 = vadd.f32 %v1518, %v1658
      %v1660 = vpop.f32.mrb[0].mxu0
      %1661 = vmatprep.mubr.bf16.mxu0 0
      %1662 = vmatmul.mubr.bf16.gmra.mrb[0].mxu0 %v1571
      %v1663 = vpop.f32.mrb[0].mxu0
      %v1664 = vadd.f32 %v1518, %v1663
      %v1665 = vpop.f32.mrb[0].mxu0
      %v1666 = vpop.f32.mrb[0].mxu0
      %v1667 = vadd.f32 %v1518, %v1666
      %v1668 = vpop.f32.mrb[0].mxu0
      %1669 = vdwg.mxu0
      %v1670 = vmax.f32 %v1608, 0.0
      %v1671 = vmax.f32 %v1611, 0.0
      %v1672 = vmax.f32 %v1616, 0.0
      %v1673 = vmax.f32 %v1619, 0.0
      %v1674 = vmax.f32 %v1624, 0.0
      %v1675 = vmax.f32 %v1627, 0.0
      %v1676 = vmax.f32 %v1632, 0.0
      %v1677 = vmax.f32 %v1635, 0.0
      %v1678 = vmax.f32 %v1640, 0.0
      %v1679 = vmax.f32 %v1643, 0.0
      %v1680 = vmax.f32 %v1648, 0.0
      %v1681 = vmax.f32 %v1651, 0.0
      %v1682 = vmax.f32 %v1656, 0.0
      %v1683 = vmax.f32 %v1659, 0.0
      %v1684 = vmax.f32 %v1664, 0.0
      %v1685 = vmax.f32 %v1667, 0.0
      %v1686 = vld [vmem:[%s11] sm:$0x1]
      %v1688 = vlaneseq
      %v1689 = vshrl.u32 %v1688, 7
      %v1690 = vsub.s32 0, %v1689
      %v1691 = vrot.slane %v1686, %v1690
      %v1693 = vmul.f32 %v1670, %v1691
      %v1694 = vmul.f32 %v1671, %v1691
      %v1695 = vmul.f32 %v1672, %v1691
      %v1696 = vmul.f32 %v1673, %v1691
      %v1697 = vmul.f32 %v1674, %v1691
      %v1698 = vmul.f32 %v1675, %v1691
      %v1699 = vmul.f32 %v1676, %v1691
      %v1700 = vmul.f32 %v1677, %v1691
      %v1701 = vmul.f32 %v1678, %v1691
      %v1702 = vmul.f32 %v1679, %v1691
      %v1703 = vmul.f32 %v1680, %v1691
      %v1704 = vmul.f32 %v1681, %v1691
      %v1705 = vmul.f32 %v1682, %v1691
      %v1706 = vmul.f32 %v1683, %v1691
      %v1707 = vmul.f32 %v1684, %v1691
      %v1708 = vmul.f32 %v1685, %v1691
      %v1709 = vld [vmem:[%s12] sm:$0x1]
      %v1711 = vlaneseq
      %v1712 = vshrl.u32 %v1711, 7
      %v1713 = vsub.s32 0, %v1712
      %v1714 = vrot.slane %v1709, %v1713
      %v1716 = vadd.f32 %v1693, %v1714
      %v1717 = vadd.f32 %v1694, %v1714
      %v1718 = vadd.f32 %v1695, %v1714
      %v1719 = vadd.f32 %v1696, %v1714
      %v1720 = vadd.f32 %v1697, %v1714
      %v1721 = vadd.f32 %v1698, %v1714
      %v1722 = vadd.f32 %v1699, %v1714
      %v1723 = vadd.f32 %v1700, %v1714
      %v1724 = vadd.f32 %v1701, %v1714
      %v1725 = vadd.f32 %v1702, %v1714
      %v1726 = vadd.f32 %v1703, %v1714
      %v1727 = vadd.f32 %v1704, %v1714
      %v1728 = vadd.f32 %v1705, %v1714
      %v1729 = vadd.f32 %v1706, %v1714
      %v1730 = vadd.f32 %v1707, %v1714
      %v1731 = vadd.f32 %v1708, %v1714
      %v1732 = vpack.c.bf16 %v1717, %v1716
      %v1733 = vpack.c.bf16 %v1719, %v1718
      %v1734 = vpack.c.bf16 %v1721, %v1720
      %v1735 = vpack.c.bf16 %v1723, %v1722
      %v1736 = vpack.c.bf16 %v1725, %v1724
      %v1737 = vpack.c.bf16 %v1727, %v1726
      %v1738 = vpack.c.bf16 %v1729, %v1728
      %v1739 = vpack.c.bf16 %v1731, %v1730
      %v1740 = vld [vmem:[%s13] sm:$0xf]
      %v1741 = vld [vmem:[%s13 + $0x4] sm:$0xf]
      %v1742 = vld [vmem:[%s13 + $0x8] sm:$0xf]
      %v1743 = vld [vmem:[%s13 + $0xc] sm:$0xf]
      %v1744 = vld [vmem:[%s14] sm:$0x1]
      %v1746 = vlaneseq
      %v1747 = vshrl.u32 %v1746, 7
      %v1748 = vsub.s32 0, %v1747
      %v1749 = vrot.slane %v1744, %v1748
      %v1755 = vunpack.c.l.b16 %v1740
      %v1756 = vunpack.c.l.b16 %v1741
      %v1757 = vunpack.c.l.b16 %v1742
      %v1758 = vunpack.c.l.b16 %v1743
      %v1759 = vpack.c.b16 %v1756, %v1755
      %v1760 = vpack.c.b16 %v1758, %v1757
      %v1764 = vsel %vm958, %v1732, 0
      %v1767 = vsel %vm958, %v1733, 0
      %v1770 = vsel %vm958, %v1734, 0
      %v1773 = vsel %vm958, %v1735, 0
      %v1776 = vsel %vm958, %v1736, 0
      %v1779 = vsel %vm958, %v1737, 0
      %v1782 = vsel %vm958, %v1738, 0
      %v1785 = vsel %vm958, %v1739, 0
      %1787 = vmatprep.subr.bf16.mxu0 0
      %1788 = vmatpush1.bf16.msra.mxu0 %v1759
      %1789 = vmatprep.subr.bf16.mxu0 0
      %1790 = vmatpush1.bf16.msra.mxu0 %v1760
      %1791 = vmatprep.subr.bf16.mxu0 0
      %1792 = vmatpush1.bf16.msra.mxu0 0
      %1793 = vmatprep.subr.bf16.mxu0 0
      %1794 = vmatpush1.bf16.msra.mxu0 0
      %1795 = vmatprep.subr.bf16.mxu0 0
      %1796 = vmatpush1.bf16.msra.mxu0 0
      %1797 = vmatprep.subr.bf16.mxu0 0
      %1798 = vmatpush1.bf16.msra.mxu0 0
      %1799 = vmatprep.subr.bf16.mxu0 0
      %1800 = vmatpush1.bf16.msra.mxu0 0
      %1801 = vmatprep.subr.bf16.mxu0 0
      %1802 = vmatpush1.bf16.msra.mxu0 0
      %1803 = vmatprep.subr.bf16.mxu0 0
      %1804 = vmatpush1.bf16.msra.mxu0 0
      %1805 = vmatprep.subr.bf16.mxu0 0
      %1806 = vmatpush1.bf16.msra.mxu0 0
      %1807 = vmatprep.subr.bf16.mxu0 0
      %1808 = vmatpush1.bf16.msra.mxu0 0
      %1809 = vmatprep.subr.bf16.mxu0 0
      %1810 = vmatpush1.bf16.msra.mxu0 0
      %1811 = vmatprep.subr.bf16.mxu0 0
      %1812 = vmatpush1.bf16.msra.mxu0 0
      %1813 = vmatprep.subr.bf16.mxu0 0
      %1814 = vmatpush1.bf16.msra.mxu0 0
      %1815 = vmatprep.subr.bf16.mxu0 0
      %1816 = vmatpush1.bf16.msra.mxu0 0
      %1817 = vmatprep.subr.bf16.mxu0 0
      %1818 = vmatpush1.bf16.msra.mxu0 0
      %1819 = vmatprep.mubr.bf16.mxu0 0
      %1820 = vmatmul.mubr.bf16.gmra.mrb[0].mxu0 %v1764
      %v1821 = vpop.f32.mrb[0].mxu0
      %v1822 = vadd.f32 %v1749, %v1821
      %v1823 = vpop.f32.mrb[0].mxu0
      %v1824 = vpop.f32.mrb[0].mxu0
      %v1825 = vadd.f32 %v1749, %v1824
      %v1826 = vpop.f32.mrb[0].mxu0
      %1827 = vmatprep.mubr.bf16.mxu0 0
      %1828 = vmatmul.mubr.bf16.gmra.mrb[0].mxu0 %v1767
      %v1829 = vpop.f32.mrb[0].mxu0
      %v1830 = vadd.f32 %v1749, %v1829
      %v1831 = vpop.f32.mrb[0].mxu0
      %v1832 = vpop.f32.mrb[0].mxu0
      %v1833 = vadd.f32 %v1749, %v1832
      %v1834 = vpop.f32.mrb[0].mxu0
      %1835 = vmatprep.mubr.bf16.mxu0 0
      %1836 = vmatmul.mubr.bf16.gmra.mrb[0].mxu0 %v1770
      %v1837 = vpop.f32.mrb[0].mxu0
      %v1838 = vadd.f32 %v1749, %v1837
      %v1839 = vpop.f32.mrb[0].mxu0
      %v1840 = vpop.f32.mrb[0].mxu0
      %v1841 = vadd.f32 %v1749, %v1840
      %v1842 = vpop.f32.mrb[0].mxu0
      %1843 = vmatprep.mubr.bf16.mxu0 0
      %1844 = vmatmul.mubr.bf16.gmra.mrb[0].mxu0 %v1773
      %v1845 = vpop.f32.mrb[0].mxu0
      %v1846 = vadd.f32 %v1749, %v1845
      %v1847 = vpop.f32.mrb[0].mxu0
      %v1848 = vpop.f32.mrb[0].mxu0
      %v1849 = vadd.f32 %v1749, %v1848
      %v1850 = vpop.f32.mrb[0].mxu0
      %1851 = vmatprep.mubr.bf16.mxu0 0
      %1852 = vmatmul.mubr.bf16.gmra.mrb[0].mxu0 %v1776
      %v1853 = vpop.f32.mrb[0].mxu0
      %v1854 = vadd.f32 %v1749, %v1853
      %v1855 = vpop.f32.mrb[0].mxu0
      %v1856 = vpop.f32.mrb[0].mxu0
      %v1857 = vadd.f32 %v1749, %v1856
      %v1858 = vpop.f32.mrb[0].mxu0
      %1859 = vmatprep.mubr.bf16.mxu0 0
      %1860 = vmatmul.mubr.bf16.gmra.mrb[0].mxu0 %v1779
      %v1861 = vpop.f32.mrb[0].mxu0
      %v1862 = vadd.f32 %v1749, %v1861
      %v1863 = vpop.f32.mrb[0].mxu0
      %v1864 = vpop.f32.mrb[0].mxu0
      %v1865 = vadd.f32 %v1749, %v1864
      %v1866 = vpop.f32.mrb[0].mxu0
      %1867 = vmatprep.mubr.bf16.mxu0 0
      %1868 = vmatmul.mubr.bf16.gmra.mrb[0].mxu0 %v1782
      %v1869 = vpop.f32.mrb[0].mxu0
      %v1870 = vadd.f32 %v1749, %v1869
      %v1871 = vpop.f32.mrb[0].mxu0
      %v1872 = vpop.f32.mrb[0].mxu0
      %v1873 = vadd.f32 %v1749, %v1872
      %v1874 = vpop.f32.mrb[0].mxu0
      %1875 = vmatprep.mubr.bf16.mxu0 0
      %1876 = vmatmul.mubr.bf16.gmra.mrb[0].mxu0 %v1785
      %v1877 = vpop.f32.mrb[0].mxu0
      %v1878 = vadd.f32 %v1749, %v1877
      %v1879 = vpop.f32.mrb[0].mxu0
      %v1880 = vpop.f32.mrb[0].mxu0
      %v1881 = vadd.f32 %v1749, %v1880
      %v1882 = vpop.f32.mrb[0].mxu0
      %1883 = vdwg.mxu0
      %v1884 = vmax.f32 %v1822, 0.0
      %v1885 = vmax.f32 %v1825, 0.0
      %v1886 = vmax.f32 %v1830, 0.0
      %v1887 = vmax.f32 %v1833, 0.0
      %v1888 = vmax.f32 %v1838, 0.0
      %v1889 = vmax.f32 %v1841, 0.0
      %v1890 = vmax.f32 %v1846, 0.0
      %v1891 = vmax.f32 %v1849, 0.0
      %v1892 = vmax.f32 %v1854, 0.0
      %v1893 = vmax.f32 %v1857, 0.0
      %v1894 = vmax.f32 %v1862, 0.0
      %v1895 = vmax.f32 %v1865, 0.0
      %v1896 = vmax.f32 %v1870, 0.0
      %v1897 = vmax.f32 %v1873, 0.0
      %v1898 = vmax.f32 %v1878, 0.0
      %v1899 = vmax.f32 %v1881, 0.0
      %v1900 = vpack.c.bf16 %v1885, %v1884
      %v1901 = vpack.c.bf16 %v1887, %v1886
      %v1902 = vpack.c.bf16 %v1889, %v1888
      %v1903 = vpack.c.bf16 %v1891, %v1890
      %v1904 = vpack.c.bf16 %v1893, %v1892
      %v1905 = vpack.c.bf16 %v1895, %v1894
      %v1906 = vpack.c.bf16 %v1897, %v1896
      %v1907 = vpack.c.bf16 %v1899, %v1898
      %v1916 = vrot.slane %v1900, 1
      %v1917 = vrot.slane %v1901, 1
      %v1918 = vsel %vm909, %v1916, %v1917
      %v1919 = vrot.slane %v1902, 1
      %v1920 = vsel %vm909, %v1917, %v1919
      %v1921 = vrot.slane %v1903, 1
      %v1922 = vsel %vm909, %v1919, %v1921
      %v1923 = vrot.slane %v1904, 1
      %v1924 = vsel %vm909, %v1921, %v1923
      %v1925 = vrot.slane %v1905, 1
      %v1926 = vsel %vm909, %v1923, %v1925
      %v1927 = vrot.slane %v1906, 1
      %v1928 = vsel %vm909, %v1925, %v1927
      %v1929 = vrot.slane %v1907, 1
      %v1930 = vsel %vm909, %v1927, %v1929
      %1931 = vrot.lane.b32.xlu0 %v1918, 32
      %v1932 = vpop.permute.xlu0 %1931
      %1933 = vrot.lane.b32.xlu0 %v1920, 32
      %v1934 = vpop.permute.xlu0 %1933
      %1935 = vrot.lane.b32.xlu0 %v1922, 32
      %v1936 = vpop.permute.xlu0 %1935
      %1937 = vrot.lane.b32.xlu0 %v1924, 32
      %v1938 = vpop.permute.xlu0 %1937
      %1939 = vrot.lane.b32.xlu0 %v1926, 32
      %v1940 = vpop.permute.xlu0 %1939
      %1941 = vrot.lane.b32.xlu0 %v1928, 32
      %v1942 = vpop.permute.xlu0 %1941
      %1943 = vrot.lane.b32.xlu0 %v1930, 32
      %v1944 = vpop.permute.xlu0 %1943
      %1945 = vrot.lane.b32.xlu0 %v1929, 32
      %v1946 = vpop.permute.xlu0 %1945
      %vm1947 = vcmask 1045504
      %v1948 = vrot.slane %v1900, 2
      %v1949 = vrot.slane %v1901, 2
      %v1950 = vsel %vm1947, %v1948, %v1949
      %v1951 = vrot.slane %v1902, 2
      %v1952 = vsel %vm1947, %v1949, %v1951
      %v1953 = vrot.slane %v1903, 2
      %v1954 = vsel %vm1947, %v1951, %v1953
      %v1955 = vrot.slane %v1904, 2
      %v1956 = vsel %vm1947, %v1953, %v1955
      %v1957 = vrot.slane %v1905, 2
      %v1958 = vsel %vm1947, %v1955, %v1957
      %v1959 = vrot.slane %v1906, 2
      %v1960 = vsel %vm1947, %v1957, %v1959
      %v1961 = vrot.slane %v1907, 2
      %v1962 = vsel %vm1947, %v1959, %v1961
      %1963 = vrot.lane.b32.xlu0 %v1950, 64
      %v1964 = vpop.permute.xlu0 %1963
      %1965 = vrot.lane.b32.xlu0 %v1952, 64
      %v1966 = vpop.permute.xlu0 %1965
      %1967 = vrot.lane.b32.xlu0 %v1954, 64
      %v1968 = vpop.permute.xlu0 %1967
      %1969 = vrot.lane.b32.xlu0 %v1956, 64
      %v1970 = vpop.permute.xlu0 %1969
      %1971 = vrot.lane.b32.xlu0 %v1958, 64
      %v1972 = vpop.permute.xlu0 %1971
      %1973 = vrot.lane.b32.xlu0 %v1960, 64
      %v1974 = vpop.permute.xlu0 %1973
      %1975 = vrot.lane.b32.xlu0 %v1962, 64
      %v1976 = vpop.permute.xlu0 %1975
      %1977 = vrot.lane.b32.xlu0 %v1961, 64
      %v1978 = vpop.permute.xlu0 %1977
      %v1981 = vsel %vm958, %v1900, %v1932
      %v1984 = vsel %vm958, %v1901, %v1934
      %v1987 = vsel %vm958, %v1902, %v1936
      %v1990 = vsel %vm958, %v1903, %v1938
      %v1993 = vsel %vm958, %v1904, %v1940
      %v1996 = vsel %vm958, %v1905, %v1942
      %v1999 = vsel %vm958, %v1906, %v1944
      %v2002 = vsel %vm958, %v1907, %v1946
      %v2004 = vsel %vm1484, %v1981, %v1964
      %v2006 = vsel %vm1484, %v1984, %v1966
      %v2008 = vsel %vm1484, %v1987, %v1968
      %v2010 = vsel %vm1484, %v1990, %v1970
      %v2012 = vsel %vm1484, %v1993, %v1972
      %v2014 = vsel %vm1484, %v1996, %v1974
      %v2016 = vsel %vm1484, %v1999, %v1976
      %v2018 = vsel %vm1484, %v2002, %v1978
      %v2019 = vld [vmem:[%s15] sm:$0xf]
      %v2020 = vld [vmem:[%s15 + $0x4] sm:$0xf]
      %v2021 = vld [vmem:[%s15 + $0x8] sm:$0xf]
      %v2022 = vld [vmem:[%s15 + $0xc] sm:$0xf]
      %v2023 = vld [vmem:[%s15 + $0x10] sm:$0xf]
      %v2024 = vld [vmem:[%s15 + $0x14] sm:$0xf]
      %v2025 = vld [vmem:[%s15 + $0x18] sm:$0xf]
      %v2026 = vld [vmem:[%s15 + $0x1c] sm:$0xf]
      %v2027 = vld [vmem:[%s15 + $0x20] sm:$0xf]
      %v2028 = vld [vmem:[%s15 + $0x24] sm:$0xf]
      %v2029 = vld [vmem:[%s15 + $0x28] sm:$0xf]
      %v2030 = vld [vmem:[%s15 + $0x2c] sm:$0xf]
      %v2031 = vld [vmem:[%s16] sm:$0x1]
      %v2033 = vlaneseq
      %v2034 = vshrl.u32 %v2033, 7
      %v2035 = vsub.s32 0, %v2034
      %v2036 = vrot.slane %v2031, %v2035
      %v2050 = vunpack.c.l.b16 %v2019
      %v2051 = vunpack.c.l.b16 %v2020
      %v2052 = vunpack.c.l.b16 %v2021
      %v2053 = vunpack.c.l.b16 %v2022
      %v2054 = vunpack.c.l.b16 %v2023
      %v2055 = vunpack.c.l.b16 %v2024
      %v2056 = vunpack.c.l.b16 %v2025
      %v2057 = vunpack.c.l.b16 %v2026
      %v2058 = vunpack.c.l.b16 %v2027
      %v2059 = vunpack.c.l.b16 %v2028
      %v2060 = vunpack.c.l.b16 %v2029
      %v2061 = vunpack.c.l.b16 %v2030
      %v2062 = vpack.c.b16 %v2051, %v2050
      %v2063 = vpack.c.b16 %v2053, %v2052
      %v2064 = vpack.c.b16 %v2055, %v2054
      %v2065 = vpack.c.b16 %v2057, %v2056
      %v2066 = vpack.c.b16 %v2059, %v2058
      %v2067 = vpack.c.b16 %v2061, %v2060
      %v2074 = vsel %vm1556, %v2004, 0
      %v2076 = vsel %vm1556, %v2006, 0
      %v2078 = vsel %vm1556, %v2008, 0
      %v2080 = vsel %vm1556, %v2010, 0
      %v2082 = vsel %vm1556, %v2012, 0
      %v2084 = vsel %vm1556, %v2014, 0
      %v2086 = vsel %vm1556, %v2016, 0
      %v2088 = vsel %vm1556, %v2018, 0
      %2090 = vmatprep.subr.bf16.mxu0 0
      %2091 = vmatpush1.bf16.msra.mxu0 %v2062
      %2092 = vmatprep.subr.bf16.mxu0 0
      %2093 = vmatpush1.bf16.msra.mxu0 %v2063
      %2094 = vmatprep.subr.bf16.mxu0 0
      %2095 = vmatpush1.bf16.msra.mxu0 %v2064
      %2096 = vmatprep.subr.bf16.mxu0 0
      %2097 = vmatpush1.bf16.msra.mxu0 %v2065
      %2098 = vmatprep.subr.bf16.mxu0 0
      %2099 = vmatpush1.bf16.msra.mxu0 %v2066
      %2100 = vmatprep.subr.bf16.mxu0 0
      %2101 = vmatpush1.bf16.msra.mxu0 %v2067
      %2102 = vmatprep.subr.bf16.mxu0 0
      %2103 = vmatpush1.bf16.msra.mxu0 0
      %2104 = vmatprep.subr.bf16.mxu0 0
      %2105 = vmatpush1.bf16.msra.mxu0 0
      %2106 = vmatprep.subr.bf16.mxu0 0
      %2107 = vmatpush1.bf16.msra.mxu0 0
      %2108 = vmatprep.subr.bf16.mxu0 0
      %2109 = vmatpush1.bf16.msra.mxu0 0
      %2110 = vmatprep.subr.bf16.mxu0 0
      %2111 = vmatpush1.bf16.msra.mxu0 0
      %2112 = vmatprep.subr.bf16.mxu0 0
      %2113 = vmatpush1.bf16.msra.mxu0 0
      %2114 = vmatprep.subr.bf16.mxu0 0
      %2115 = vmatpush1.bf16.msra.mxu0 0
      %2116 = vmatprep.subr.bf16.mxu0 0
      %2117 = vmatpush1.bf16.msra.mxu0 0
      %2118 = vmatprep.subr.bf16.mxu0 0
      %2119 = vmatpush1.bf16.msra.mxu0 0
      %2120 = vmatprep.subr.bf16.mxu0 0
      %2121 = vmatpush1.bf16.msra.mxu0 0
      %2122 = vmatprep.mubr.bf16.mxu0 0
      %2123 = vmatmul.mubr.bf16.gmra.mrb[0].mxu0 %v2074
      %v2124 = vpop.f32.mrb[0].mxu0
      %v2125 = vadd.f32 %v2036, %v2124
      %v2126 = vpop.f32.mrb[0].mxu0
      %v2127 = vpop.f32.mrb[0].mxu0
      %v2128 = vadd.f32 %v2036, %v2127
      %v2129 = vpop.f32.mrb[0].mxu0
      %2130 = vmatprep.mubr.bf16.mxu0 0
      %2131 = vmatmul.mubr.bf16.gmra.mrb[0].mxu0 %v2076
      %v2132 = vpop.f32.mrb[0].mxu0
      %v2133 = vadd.f32 %v2036, %v2132
      %v2134 = vpop.f32.mrb[0].mxu0
      %v2135 = vpop.f32.mrb[0].mxu0
      %v2136 = vadd.f32 %v2036, %v2135
      %v2137 = vpop.f32.mrb[0].mxu0
      %2138 = vmatprep.mubr.bf16.mxu0 0
      %2139 = vmatmul.mubr.bf16.gmra.mrb[0].mxu0 %v2078
      %v2140 = vpop.f32.mrb[0].mxu0
      %v2141 = vadd.f32 %v2036, %v2140
      %v2142 = vpop.f32.mrb[0].mxu0
      %v2143 = vpop.f32.mrb[0].mxu0
      %v2144 = vadd.f32 %v2036, %v2143
      %v2145 = vpop.f32.mrb[0].mxu0
      %2146 = vmatprep.mubr.bf16.mxu0 0
      %2147 = vmatmul.mubr.bf16.gmra.mrb[0].mxu0 %v2080
      %v2148 = vpop.f32.mrb[0].mxu0
      %v2149 = vadd.f32 %v2036, %v2148
      %v2150 = vpop.f32.mrb[0].mxu0
      %v2151 = vpop.f32.mrb[0].mxu0
      %v2152 = vadd.f32 %v2036, %v2151
      %v2153 = vpop.f32.mrb[0].mxu0
      %2154 = vmatprep.mubr.bf16.mxu0 0
      %2155 = vmatmul.mubr.bf16.gmra.mrb[0].mxu0 %v2082
      %v2156 = vpop.f32.mrb[0].mxu0
      %v2157 = vadd.f32 %v2036, %v2156
      %v2158 = vpop.f32.mrb[0].mxu0
      %v2159 = vpop.f32.mrb[0].mxu0
      %v2160 = vadd.f32 %v2036, %v2159
      %v2161 = vpop.f32.mrb[0].mxu0
      %2162 = vmatprep.mubr.bf16.mxu0 0
      %2163 = vmatmul.mubr.bf16.gmra.mrb[0].mxu0 %v2084
      %v2164 = vpop.f32.mrb[0].mxu0
      %v2165 = vadd.f32 %v2036, %v2164
      %v2166 = vpop.f32.mrb[0].mxu0
      %v2167 = vpop.f32.mrb[0].mxu0
      %v2168 = vadd.f32 %v2036, %v2167
      %v2169 = vpop.f32.mrb[0].mxu0
      %2170 = vmatprep.mubr.bf16.mxu0 0
      %2171 = vmatmul.mubr.bf16.gmra.mrb[0].mxu0 %v2086
      %v2172 = vpop.f32.mrb[0].mxu0
      %v2173 = vadd.f32 %v2036, %v2172
      %v2174 = vpop.f32.mrb[0].mxu0
      %v2175 = vpop.f32.mrb[0].mxu0
      %v2176 = vadd.f32 %v2036, %v2175
      %v2177 = vpop.f32.mrb[0].mxu0
      %2178 = vmatprep.mubr.bf16.mxu0 0
      %2179 = vmatmul.mubr.bf16.gmra.mrb[0].mxu0 %v2088
      %v2180 = vpop.f32.mrb[0].mxu0
      %v2181 = vadd.f32 %v2036, %v2180
      %v2182 = vpop.f32.mrb[0].mxu0
      %v2183 = vpop.f32.mrb[0].mxu0
      %v2184 = vpop.f32.mrb[0].mxu0
      %2185 = vdwg.mxu0
      %v2186 = vmax.f32 %v2125, 0.0
      %v2187 = vmax.f32 %v2128, 0.0
      %v2188 = vmax.f32 %v2133, 0.0
      %v2189 = vmax.f32 %v2136, 0.0
      %v2190 = vmax.f32 %v2141, 0.0
      %v2191 = vmax.f32 %v2144, 0.0
      %v2192 = vmax.f32 %v2149, 0.0
      %v2193 = vmax.f32 %v2152, 0.0
      %v2194 = vmax.f32 %v2157, 0.0
      %v2195 = vmax.f32 %v2160, 0.0
      %v2196 = vmax.f32 %v2165, 0.0
      %v2197 = vmax.f32 %v2168, 0.0
      %v2198 = vmax.f32 %v2173, 0.0
      %v2199 = vmax.f32 %v2176, 0.0
      %v2200 = vmax.f32 %v2181, 0.0
      %v2201 = vld [vmem:[%s17] sm:$0x1]
      %v2203 = vlaneseq
      %v2204 = vshrl.u32 %v2203, 7
      %v2205 = vsub.s32 0, %v2204
      %v2206 = vrot.slane %v2201, %v2205
      %v2208 = vmul.f32 %v2186, %v2206
      %v2209 = vmul.f32 %v2187, %v2206
      %v2210 = vmul.f32 %v2188, %v2206
      %v2211 = vmul.f32 %v2189, %v2206
      %v2212 = vmul.f32 %v2190, %v2206
      %v2213 = vmul.f32 %v2191, %v2206
      %v2214 = vmul.f32 %v2192, %v2206
      %v2215 = vmul.f32 %v2193, %v2206
      %v2216 = vmul.f32 %v2194, %v2206
      %v2217 = vmul.f32 %v2195, %v2206
      %v2218 = vmul.f32 %v2196, %v2206
      %v2219 = vmul.f32 %v2197, %v2206
      %v2220 = vmul.f32 %v2198, %v2206
      %v2221 = vmul.f32 %v2199, %v2206
      %v2222 = vmul.f32 %v2200, %v2206
      %v2223 = vld [vmem:[%s18] sm:$0x1]
      %v2225 = vlaneseq
      %v2226 = vshrl.u32 %v2225, 7
      %v2227 = vsub.s32 0, %v2226
      %v2228 = vrot.slane %v2223, %v2227
      %v2230 = vadd.f32 %v2208, %v2228
      %v2231 = vadd.f32 %v2209, %v2228
      %v2232 = vadd.f32 %v2210, %v2228
      %v2233 = vadd.f32 %v2211, %v2228
      %v2234 = vadd.f32 %v2212, %v2228
      %v2235 = vadd.f32 %v2213, %v2228
      %v2236 = vadd.f32 %v2214, %v2228
      %v2237 = vadd.f32 %v2215, %v2228
      %v2238 = vadd.f32 %v2216, %v2228
      %v2239 = vadd.f32 %v2217, %v2228
      %v2240 = vadd.f32 %v2218, %v2228
      %v2241 = vadd.f32 %v2219, %v2228
      %v2242 = vadd.f32 %v2220, %v2228
      %v2243 = vadd.f32 %v2221, %v2228
      %v2244 = vadd.f32 %v2222, %v2228
      %2245 = vst.msk [vmem:[#allocation2] sm:$0xff] %vm958, %v2230
      %2246 = vst.msk [vmem:[#allocation2 + $0x8] sm:$0xff] %vm958, %v2231
      %2247 = vst.msk [vmem:[#allocation2 + $0x10] sm:$0xff] %vm958, %v2232
      %2248 = vst.msk [vmem:[#allocation2 + $0x18] sm:$0xff] %vm958, %v2233
      %2249 = vst.msk [vmem:[#allocation2 + $0x20] sm:$0xff] %vm958, %v2234
      %2250 = vst.msk [vmem:[#allocation2 + $0x28] sm:$0xff] %vm958, %v2235
      %2251 = vst.msk [vmem:[#allocation2 + $0x30] sm:$0xff] %vm958, %v2236
      %2252 = vst.msk [vmem:[#allocation2 + $0x38] sm:$0xff] %vm958, %v2237
      %2253 = vst.msk [vmem:[#allocation2 + $0x40] sm:$0xff] %vm958, %v2238
      %2254 = vst.msk [vmem:[#allocation2 + $0x48] sm:$0xff] %vm958, %v2239
      %2255 = vst.msk [vmem:[#allocation2 + $0x50] sm:$0xff] %vm958, %v2240
      %2256 = vst.msk [vmem:[#allocation2 + $0x58] sm:$0xff] %vm958, %v2241
      %2257 = vst.msk [vmem:[#allocation2 + $0x60] sm:$0xff] %vm958, %v2242
      %2258 = vst.msk [vmem:[#allocation2 + $0x68] sm:$0xff] %vm958, %v2243
      %2259 = vst.msk [vmem:[#allocation2 + $0x70] sm:$0xff] %vm958, %v2244
      %2260 = vst.msk [vmem:[#allocation2 + $0x78] sm:$0xff] %vm958, 0.0
      %v2261 = vld [vmem:[#allocation2] ss:$2 sm:$0xff]
      %s2262 = scalar_lea.vmem [#allocation2], 16
      %v2263 = vld [vmem:[%s2262] ss:$2 sm:$0xff]
      %s2264 = scalar_lea.vmem [#allocation2], 32
      %v2265 = vld [vmem:[%s2264] ss:$2 sm:$0xff]
      %s2266 = scalar_lea.vmem [#allocation2], 48
      %v2267 = vld [vmem:[%s2266] ss:$2 sm:$0xff]
      %s2268 = scalar_lea.vmem [#allocation2], 64
      %v2269 = vld [vmem:[%s2268] ss:$2 sm:$0xff]
      %s2270 = scalar_lea.vmem [#allocation2], 80
      %v2271 = vld [vmem:[%s2270] ss:$2 sm:$0xff]
      %s2272 = scalar_lea.vmem [#allocation2], 96
      %v2273 = vld [vmem:[%s2272] ss:$2 sm:$0xff]
      %s2274 = scalar_lea.vmem [#allocation2], 112
      %v2275 = vld [vmem:[%s2274] ss:$2 sm:$0xff]
      %2284 = vrot.lane.b32.xlu0 %v2261, 112
      %v2285 = vpop.permute.xlu0 %2284
      %2286 = vrot.lane.b32.xlu0 %v2263, 112
      %v2287 = vpop.permute.xlu0 %2286
      %2288 = vrot.lane.b32.xlu0 %v2265, 112
      %v2289 = vpop.permute.xlu0 %2288
      %2290 = vrot.lane.b32.xlu0 %v2267, 112
      %v2291 = vpop.permute.xlu0 %2290
      %2292 = vrot.lane.b32.xlu0 %v2269, 112
      %v2293 = vpop.permute.xlu0 %2292
      %2294 = vrot.lane.b32.xlu0 %v2271, 112
      %v2295 = vpop.permute.xlu0 %2294
      %2296 = vrot.lane.b32.xlu0 %v2273, 112
      %v2297 = vpop.permute.xlu0 %2296
      %2298 = vrot.lane.b32.xlu0 %v2275, 112
      %v2299 = vpop.permute.xlu0 %2298
      %v2308 = vmax.f32 %v2261, %v2285
      %v2309 = vmax.f32 %v2263, %v2287
      %v2310 = vmax.f32 %v2265, %v2289
      %v2311 = vmax.f32 %v2267, %v2291
      %v2312 = vmax.f32 %v2269, %v2293
      %v2313 = vmax.f32 %v2271, %v2295
      %v2314 = vmax.f32 %v2273, %v2297
      %v2315 = vmax.f32 %v2275, %v2299
      %2316 = vst.msk [vmem:[%s604] sm:$0xff] %vm941, %v2308
      %2317 = vst.msk [vmem:[%s604 + $0x8] sm:$0xff] %vm941, %v2309
      %2318 = vst.msk [vmem:[%s604 + $0x10] sm:$0xff] %vm941, %v2310
      %2319 = vst.msk [vmem:[%s604 + $0x18] sm:$0xff] %vm941, %v2311
      %2320 = vst.msk [vmem:[%s604 + $0x20] sm:$0xff] %vm941, %v2312
      %2321 = vst.msk [vmem:[%s604 + $0x28] sm:$0xff] %vm941, %v2313
      %2322 = vst.msk [vmem:[%s604 + $0x30] sm:$0xff] %vm941, %v2314
      %2323 = vst.msk [vmem:[%s604 + $0x38] sm:$0xff] %vm941, %v2315
      %s2324 = smul.u32 8, %s30
      %p2325 = scmp.lt.s32.totalorder %s2324, 15
      %s2326 = scalar_select %p2325, %s2324, 15
      %s2327 = smul.addr %s2326, 8
      %s2328 = scalar_lea.vmem %s19, %s2327
      // Predicated region
      $region97: #{tpu_custom_call.1} parent=95 // pred_check
        %p2329 = pneg %p452
      $region98: #{tpu_custom_call.1} parent=95 // pred_check_branch
        %2331 = sbr.rel (%p2329) target = $region100
      $region99: #{tpu_custom_call.1} parent=95 // pred_region
        %s2332 = smul.u32 8, %s30
      $region100: #{tpu_custom_call.1} parent=95 // pred_fallthru
        _
    $region96: #{tpu_custom_call.1} parent=5 // pred_fallthru
      _
    %p2333 = scmp.le.s32.totalorder 2, %s25
    // Predicated region
    $region101: #{tpu_custom_call.1} parent=5 // pred_check
      %p2334 = pneg %p2333
    $region102: #{tpu_custom_call.1} parent=5 // pred_check_branch
      %2336 = sbr.rel (%p2334) target = $region104
    $region103: #{tpu_custom_call.1} parent=5 // pred_region
      %s2337 = ssub.s32 %s25, 2
      // Predicated region
      $region105: #{tpu_custom_call.1} parent=103 // pred_check
        %p2338 = pneg %p458
      $region106: #{tpu_custom_call.1} parent=103 // pred_check_branch
        %2340 = sbr.rel (%p2338) target = $region108
      $region107: #{tpu_custom_call.1} parent=103 // pred_region
        %s2341 = smul.u32 8, %s31
        %p2342 = scmp.lt.s32.totalorder %s2341, 15
        %s2343 = scalar_select %p2342, %s2341, 15
        %s2344 = smul.addr %s2343, 8
        %s2345 = scalar_lea.vmem %s19, %s2344
      $region108: #{tpu_custom_call.1} parent=103 // pred_fallthru
        _
    $region104: #{tpu_custom_call.1} parent=5 // pred_fallthru
      _
  $region6: #{tpu_custom_call.1} parent=0 // loop_footer
    %s29 = sadd.s32 1, %s25
  $region7: #{tpu_custom_call.1} parent=0 // loop_footer_branch
    %24 = sbr.rel target = $region3
  $region8: #{tpu_custom_call.1} parent=0 // loop_exit
    _

</llo_original>
